<compile_context>
chip_gen: v7x
topology: tpu7x:2x2x1
jax: 0.10.0
libtpu: 0.0.40
codegen_flags: <defaults>
</compile_context>

<pallas_src>
import functools
import math

import jax
import jax.numpy as jnp
from jax.experimental import pallas as pl
from jax.experimental.pallas import tpu as pltpu


HPARAMS = dict(
    n_features=4,          # per-frame feature dim of obs_data / predictions
    time_enc_dim=16,
    att_dim=16,            # per-head dim
    model_dim=32,
    inner_dim=64,
    expand_dim=64,
    n_layers=2,
    n_heads=2,
    n_max_time_scale=500,
    n_max_level=4,
    stochastic=False,
    max_obs_len=8,         # static caps: To / Ti are padded to these so one kernel
    max_imp_len=8,         #   compile serves every level of the NRTSI outer loop
)

_NEG_INF = -1e30


def _round_up(n, m):
    return ((n + m - 1) // m) * m


# ----------------------------- parameter packing -----------------------------

def make_layout(hp):
    """Static row/column layout of the packed bf16 weight blob and f32 bias blob."""
    D = hp["model_dim"]; H = hp["n_heads"]; Dh = hp["att_dim"]; HD = H * Dh
    I = hp["inner_dim"]; E = hp["expand_dim"]; F = hp["n_features"]
    TE = hp["time_enc_dim"]; L = hp["n_layers"]

    F_obs = F + TE             # obs token raw features: [obs_data, time_enc]
    F_imp = TE + 1             # imp token raw features: [time_enc, log2(gap)]
    F_in = F_obs + F_imp + 2   # + obs/imp indicator columns (fold both emb biases in)
    F_in_pad = _round_up(F_in, 8)

    w_entries, wrow = {}, 0

    def add_w(name, din, dout):
        nonlocal wrow
        w_entries[name] = (wrow, din, dout)
        wrow += _round_up(din, 16)        # bf16 sublane-tile aligned region starts

    add_w("emb", F_in_pad, D)
    for l in range(L):
        add_w(f"wqkv{l}", D, 3 * HD)      # fused Q|K|V projection
        add_w(f"wo{l}", HD, D)
        add_w(f"wff1{l}", D, I)
        add_w(f"wff2{l}", I, D)
    add_w("wout1", D, E)
    add_w("wout2", E, F)

    b_entries, brow = {}, 0

    def add_b(name, dout):
        nonlocal brow
        b_entries[name] = (brow, dout)
        brow += 1

    for l in range(L):
        for nm, dout in ((f"bqkv{l}", 3 * HD), (f"bo{l}", D),
                         (f"ln1g{l}", D), (f"ln1b{l}", D),
                         (f"bff1{l}", I), (f"bff2{l}", D),
                         (f"ln2g{l}", D), (f"ln2b{l}", D)):
            add_b(nm, dout)
    add_b("bout1", E)
    add_b("bout2", F)

    return dict(w_entries=w_entries, n_wrows=wrow,
                b_entries=b_entries, n_brows=_round_up(brow, 8),
                f_obs=F_obs, f_imp=F_imp, f_in=F_in, f_in_pad=F_in_pad)


def init_packed_params(key, hp):
    """Random init, packed directly into the two blobs (weights cast to bf16 once)."""
    layout = make_layout(hp)
    D = hp["model_dim"]; H = hp["n_heads"]; Dh = hp["att_dim"]; HD = H * Dh
    I = hp["inner_dim"]; E = hp["expand_dim"]; F = hp["n_features"]
    L = hp["n_layers"]
    F_obs, F_imp, F_in_pad = layout["f_obs"], layout["f_imp"], layout["f_in_pad"]

    keys = iter(jax.random.split(key, 128))

    def wmat(din, dout):
        return jax.random.normal(next(keys), (din, dout), jnp.float32) / math.sqrt(din)

    def bv(dout):
        return 0.01 * jax.random.normal(next(keys), (dout,), jnp.float32)

    wblob = jnp.zeros((layout["n_wrows"], 128), jnp.float32)
    bblob = jnp.zeros((layout["n_brows"], 128), jnp.float32)

    def set_w(name, mat):
        nonlocal wblob
        off, din, dout = layout["w_entries"][name]
        assert mat.shape == (din, dout)
        wblob = wblob.at[off:off + din, 0:dout].set(mat)

    def set_b(name, vec):
        nonlocal bblob
        off, dout = layout["b_entries"][name]
        bblob = bblob.at[off, 0:dout].set(vec)

    # block-stacked embedding weight: [w_obs ; w_imp ; b_obs ; b_imp ; zero pad]
    emb = jnp.zeros((F_in_pad, D), jnp.float32)
    emb = emb.at[0:F_obs, :].set(wmat(F_obs, D))
    emb = emb.at[F_obs:F_obs + F_imp, :].set(wmat(F_imp, D))
    emb = emb.at[F_obs + F_imp, :].set(bv(D))        # obs-token bias (indicator column)
    emb = emb.at[F_obs + F_imp + 1, :].set(bv(D))    # imp-token bias (indicator column)
    set_w("emb", emb)

    for l in range(L):
        set_w(f"wqkv{l}", wmat(D, 3 * HD)); set_b(f"bqkv{l}", bv(3 * HD))
        set_w(f"wo{l}", wmat(HD, D));       set_b(f"bo{l}", bv(D))
        set_b(f"ln1g{l}", jnp.ones((D,), jnp.float32))
        set_b(f"ln1b{l}", jnp.zeros((D,), jnp.float32))
        set_w(f"wff1{l}", wmat(D, I));      set_b(f"bff1{l}", bv(I))
        set_w(f"wff2{l}", wmat(I, D));      set_b(f"bff2{l}", bv(D))
        set_b(f"ln2g{l}", jnp.ones((D,), jnp.float32))
        set_b(f"ln2b{l}", jnp.zeros((D,), jnp.float32))
    set_w("wout1", wmat(D, E)); set_b("bout1", bv(E))
    set_w("wout2", wmat(E, F)); set_b("bout2", bv(F))

    return {"wblob": wblob.astype(jnp.bfloat16),   # weights live in bf16 persistently
            "bblob": bblob,                        # biases / LayerNorm params stay f32
            "layout": layout}


# ----------------------------- fused Pallas kernel -----------------------------

def _nrtsi_fused_kernel(tok_ref, kmask_ref, w_ref, b_ref, out_ref, *,
                        layout, B, T, H, Dh, n_layers, eps):
    """Whole NRTSIImputer forward; every intermediate stays in VMEM/vregs."""
    M = B * T
    HD = H * Dh
    scale = 1.0 / math.sqrt(Dh)
    WE = layout["w_entries"]
    BE = layout["b_entries"]

    def wmat(name):
        off, din, dout = WE[name]
        return w_ref[off:off + din, 0:dout]          # bf16 [din, dout], static slice

    def bvec(name):
        off, dout = BE[name]
        return b_ref[off:off + 1, 0:dout]            # f32 [1, dout]

    def mm(x, wname, bname=None, relu=False):
        # bf16 MXU operands, f32 accumulation.
        y = jnp.dot(x.astype(jnp.bfloat16), wmat(wname),
                    preferred_element_type=jnp.float32)
        if bname is not None:
            y = y + bvec(bname)
        if relu:
            y = jnp.maximum(y, 0.0)
        return y

    def layer_norm(x, gname, bname):
        mu = jnp.mean(x, axis=-1, keepdims=True)
        var = jnp.mean(jnp.square(x - mu), axis=-1, keepdims=True)
        return (x - mu) * jax.lax.rsqrt(var + eps) * bvec(gname) + bvec(bname)

    kmask = kmask_ref[...]                           # [T, T] additive key mask (0 / -1e30)

    # --- token embedding: ONE matmul against the block-stacked embedding weight ---
    x = mm(tok_ref[...], "emb")                      # [M, D] f32

    # --- transformer layers (statically unrolled; n_layers is tiny) ---
    for l in range(n_layers):
        qkv = mm(x, f"wqkv{l}", f"bqkv{l}")          # fused QKV: [M, 3*HD]
        heads = []
        for h in range(H):                            # H == 2; einsums batched over B
            qh = qkv[:, h * Dh:(h + 1) * Dh].reshape(B, T, Dh)
            kh = qkv[:, HD + h * Dh:HD + (h + 1) * Dh].reshape(B, T, Dh)
            vh = qkv[:, 2 * HD + h * Dh:2 * HD + (h + 1) * Dh].reshape(B, T, Dh)
            s = jnp.einsum('bqd,bkd->bqk',
                           qh.astype(jnp.bfloat16), kh.astype(jnp.bfloat16),
                           preferred_element_type=jnp.float32) * scale
            s = s + kmask                             # mask padded key positions
            m = jnp.max(s, axis=-1, keepdims=True)
            p = jnp.exp(s - m)
            p = p * pl.reciprocal(jnp.sum(p, axis=-1, keepdims=True), approx=True)
            oh = jnp.einsum('bqk,bkd->bqd',
                            p.astype(jnp.bfloat16), vh.astype(jnp.bfloat16),
                            preferred_element_type=jnp.float32)
            heads.append(oh.reshape(M, Dh))
        # merge heads (lane concat) -> single output-projection matmul (no per-head
        # accumulate matmuls / MRF pops on v5e/v6e).
        attn = mm(jnp.concatenate(heads, axis=-1), f"wo{l}", f"bo{l}")
        x = layer_norm(x + attn, f"ln1g{l}", f"ln1b{l}")

        ff = mm(x, f"wff1{l}", f"bff1{l}", relu=True)
        ff = mm(ff, f"wff2{l}", f"bff2{l}")
        x = layer_norm(x + ff, f"ln2g{l}", f"ln2b{l}")

    # --- output head on ALL tokens (8-sublane aligned); wrapper slices imputed rows ---
    h1 = mm(x, "wout1", "bout1", relu=True)
    out_ref[...] = mm(h1, "wout2", "bout2").astype(out_ref.dtype)


# ----------------------------- model glue ---------------------------------

def time_encoding(t, time_enc_dim, n_max_time_scale):
    """Sinusoidal time encoding. t: [B, T, 1] -> [B, T, time_enc_dim]."""
    tf = t.astype(jnp.float32)
    half = time_enc_dim // 2
    freqs = jnp.exp(-jnp.arange(half, dtype=jnp.float32)
                    * (math.log(float(n_max_time_scale)) / max(half - 1, 1)))
    ang = tf * freqs
    return jnp.concatenate([jnp.sin(ang), jnp.cos(ang)], axis=-1)


def nrtsi_imputer_forward(wblob, bblob, obs_data, obs_list, next_list, *, gap, hp, layout):
    """Equivalent of NRTSI.forward2 / self.model(obs_data, obs_list, next_list, gap).

    obs_data : [B, To, F]   observed frames
    obs_list : [B, To, 1]   observed time indices
    next_list: [B, Ti, 1]   time indices to impute
    gap      : python int   imputation gap (log2(gap) feature)
    returns  : [B, Ti, F]   imputed features
    """
    B, To, F = obs_data.shape
    Ti = next_list.shape[1]
    To_max, Ti_max = hp["max_obs_len"], hp["max_imp_len"]
    assert To <= To_max and Ti <= Ti_max
    T = To_max + Ti_max
    M = B * T
    TE = hp["time_enc_dim"]
    F_obs, F_imp = layout["f_obs"], layout["f_imp"]
    F_in, F_in_pad = layout["f_in"], layout["f_in_pad"]
    pad_tail = F_in_pad - F_in

    # ---- token feature slab assembled in XLA (cheap, fused), lane-dense 2-D for the kernel ----
    obs_te = time_encoding(obs_list, TE, hp["n_max_time_scale"])
    imp_te = time_encoding(next_list, TE, hp["n_max_time_scale"])
    gap_feat = jnp.full((B, Ti, 1), math.log2(float(gap)), jnp.float32)

    obs_feat = jnp.concatenate(
        [obs_data.astype(jnp.float32), obs_te,                   # obs raw features
         jnp.zeros((B, To, F_imp), jnp.float32),                 # (imp feature slot unused)
         jnp.ones((B, To, 1), jnp.float32),                      # obs indicator -> b_obs
         jnp.zeros((B, To, 1 + pad_tail), jnp.float32)], axis=-1)
    imp_feat = jnp.concatenate(
        [jnp.zeros((B, Ti, F_obs), jnp.float32),                 # (obs feature slot unused)
         imp_te, gap_feat,                                       # imp raw features
         jnp.zeros((B, Ti, 1), jnp.float32),
         jnp.ones((B, Ti, 1), jnp.float32),                      # imp indicator -> b_imp
         jnp.zeros((B, Ti, pad_tail), jnp.float32)], axis=-1)
    tok = jnp.concatenate(
        [obs_feat, jnp.zeros((B, To_max - To, F_in_pad), jnp.float32),
         imp_feat, jnp.zeros((B, Ti_max - Ti, F_in_pad), jnp.float32)], axis=1)
    tok = tok.reshape(1, M, F_in_pad)                            # leading group axis (G=1)

    # additive key mask for padded positions (shared across batch and queries)
    pos = jnp.arange(T)
    valid = (pos < To) | ((pos >= To_max) & (pos < To_max + Ti))
    kmask_row = jnp.where(valid, 0.0, _NEG_INF).astype(jnp.float32)
    kmask = jnp.broadcast_to(kmask_row[None, :], (T, T)).reshape(1, T, T)

    kernel = functools.partial(
        _nrtsi_fused_kernel, layout=layout,
        B=B, T=T, H=hp["n_heads"], Dh=hp["att_dim"],
        n_layers=hp["n_layers"], eps=1e-5)

    pred_all = pl.pallas_call(
        kernel,
        # Leading "group" axis: independent imputation levels / samples stack here to
        # amortize launch overhead and use v7x's second TensorCore (G=1 in this demo).
        grid=(1,),
        in_specs=[pl.BlockSpec((None, M, F_in_pad), lambda g: (g, 0, 0)),
                  pl.BlockSpec((None, T, T), lambda g: (g, 0, 0)),
                  pl.BlockSpec(wblob.shape, lambda g: (0, 0)),
                  pl.BlockSpec(bblob.shape, lambda g: (0, 0))],
        out_specs=pl.BlockSpec((None, M, F), lambda g: (g, 0, 0)),
        out_shape=jax.ShapeDtypeStruct((1, M, F), jnp.float32),
        compiler_params=pltpu.CompilerParams(dimension_semantics=("parallel",)),
    )(tok, kmask, wblob, bblob)

    # head ran on all (padded) tokens; slice the imputed rows here (free in XLA)
    return pred_all.reshape(B, T, F)[:, To_max:To_max + Ti, :]


# TODO(synk): the outer NRTSI.forward loop (numpy/random mask generation, the
# get_next_to_impute while-loop, gap_models state_dict swapping, loss/ret-dict glue)
# is host-side, data-dependent orchestration with no clean Pallas equivalent; only the
# imputer hot path (forward2) is a kernel. Multiple levels/samples produced by that
# loop should be stacked on the leading group grid axis of this pallas_call.
# TODO(synk): if the model is scaled up (large B/T/D/L), stream per-layer weights with
# a grid axis over layers (or pltpu.emit_pipeline) and set vmem_limit_bytes — needed
# first on v7x (64 MiB VMEM).


if __name__ == "__main__":
    hp = HPARAMS
    B = 2
    seq_len = 8
    F = hp["n_features"]
    gap = 2

    key = jax.random.PRNGKey(0)
    k_in, k_par = jax.random.split(key)

    # one imputation "level" of the NRTSI outer loop
    obs_idx = jnp.array([0, 2, 4, 6, 7], dtype=jnp.int32)     # To = 5
    next_idx = jnp.array([1, 3, 5], dtype=jnp.int32)          # Ti = 3
    To, Ti = obs_idx.shape[0], next_idx.shape[0]

    full_seq = jax.random.normal(k_in, (B, seq_len, F), jnp.float32)   # "input_data"
    obs_data = full_seq[:, obs_idx, :]                                  # [B, To, F]
    gt_data = full_seq[:, next_idx, :]                                  # [B, Ti, F]
    obs_list = jnp.broadcast_to(obs_idx[None, :, None], (B, To, 1))
    next_list = jnp.broadcast_to(next_idx[None, :, None], (B, Ti, 1))

    packed = init_packed_params(k_par, hp)

    fwd = jax.jit(functools.partial(nrtsi_imputer_forward,
                                    gap=gap, hp=hp, layout=packed["layout"]))
    pred = fwd(packed["wblob"], packed["bblob"], obs_data, obs_list, next_list)
    jax.block_until_ready(pred)

    # module glue: the non-stochastic per-level training loss (L1 on imputed frames)
    l1 = jnp.mean(jnp.abs(pred - gt_data))
    jax.block_until_ready(l1)

    assert pred.shape == (B, Ti, F)
    assert bool(jnp.all(jnp.isfinite(pred)))
    print("KERNEL_OK")
</pallas_src>

<mosaic_0001>
module attributes {stable_mosaic.version = 11 : i64} {
  func.func @_nrtsi_fused_kernel(%arg0: i32, %arg1: memref<1x32x40xf32, #tpu.memory_space<vmem>>, %arg2: memref<1x16x16xf32, #tpu.memory_space<vmem>>, %arg3: memref<464x128xbf16, #tpu.memory_space<vmem>>, %arg4: memref<24x128xf32, #tpu.memory_space<vmem>>, %arg5: memref<1x32x4xf32, #tpu.memory_space<vmem>>) attributes {dimension_semantics = [#tpu.dimension_semantics<parallel>], iteration_bounds = array<i64: 1>, scalar_prefetch = 0 : i64, scratch_operands = 0 : i64, tpu.core_type = #tpu.core_type<tc>, window_params = [{transform_indices = @transform_0, window_bounds = array<i64: 1, 32, 40>}, {transform_indices = @transform_1, window_bounds = array<i64: 1, 16, 16>}, {pipeline_mode = #tpu.pipeline_mode<synchronous>, transform_indices = @transform_2, window_bounds = array<i64: 464, 128>}, {pipeline_mode = #tpu.pipeline_mode<synchronous>, transform_indices = @transform_3, window_bounds = array<i64: 24, 128>}, {transform_indices = @transform_4, window_bounds = array<i64: 1, 32, 4>}]} {
    %c0 = arith.constant 0 : index
    %c0_0 = arith.constant 0 : index
    %c0_1 = arith.constant 0 : index
    %0 = vector.load %arg2[%c0, %c0_0, %c0_1] : memref<1x16x16xf32, #tpu.memory_space<vmem>>, vector<1x16x16xf32>
    %1 = vector.shape_cast %0 : vector<1x16x16xf32> to vector<16x16xf32>
    %c0_2 = arith.constant 0 : index
    %c0_3 = arith.constant 0 : index
    %c0_4 = arith.constant 0 : index
    %2 = vector.load %arg1[%c0_2, %c0_3, %c0_4] : memref<1x32x40xf32, #tpu.memory_space<vmem>>, vector<1x32x40xf32>
    %3 = vector.shape_cast %2 : vector<1x32x40xf32> to vector<32x40xf32>
    %4 = arith.truncf %3 : vector<32x40xf32> to vector<32x40xbf16>
    %c0_5 = arith.constant 0 : index
    %c0_6 = arith.constant 0 : index
    %5 = vector.load %arg3[%c0_5, %c0_6] : memref<464x128xbf16, #tpu.memory_space<vmem>>, vector<40x32xbf16>
    %cst = arith.constant dense<0.000000e+00> : vector<32x32xf32>
    %6 = tpu.matmul %4, %5, %cst {dimension_numbers = #tpu.dot_dimension_numbers<[1], [0], [0], [1], [0, 0, 1, 1], [], []>} : vector<32x40xbf16>, vector<40x32xbf16>, vector<32x32xf32> -> vector<32x32xf32>
    %7 = arith.truncf %6 : vector<32x32xf32> to vector<32x32xbf16>
    %c48 = arith.constant 48 : index
    %c0_7 = arith.constant 0 : index
    %8 = vector.load %arg3[%c48, %c0_7] : memref<464x128xbf16, #tpu.memory_space<vmem>>, vector<32x96xbf16>
    %cst_8 = arith.constant dense<0.000000e+00> : vector<32x96xf32>
    %9 = tpu.matmul %7, %8, %cst_8 {dimension_numbers = #tpu.dot_dimension_numbers<[1], [0], [0], [1], [0, 0, 1, 1], [], []>} : vector<32x32xbf16>, vector<32x96xbf16>, vector<32x96xf32> -> vector<32x96xf32>
    %c0_9 = arith.constant 0 : index
    %c0_10 = arith.constant 0 : index
    %10 = vector.load %arg4[%c0_9, %c0_10] : memref<24x128xf32, #tpu.memory_space<vmem>>, vector<1x96xf32>
    %11 = vector.broadcast %10 : vector<1x96xf32> to vector<32x96xf32>
    %12 = arith.addf %9, %11 : vector<32x96xf32>
    %13 = vector.extract_strided_slice %12 {offsets = [0, 0], sizes = [32, 16], strides = [1, 1]} : vector<32x96xf32> to vector<32x16xf32>
    %14 = vector.shape_cast %13 : vector<32x16xf32> to vector<2x16x16xf32>
    %15 = vector.extract_strided_slice %12 {offsets = [0, 32], sizes = [32, 16], strides = [1, 1]} : vector<32x96xf32> to vector<32x16xf32>
    %16 = vector.shape_cast %15 : vector<32x16xf32> to vector<2x16x16xf32>
    %17 = vector.extract_strided_slice %12 {offsets = [0, 64], sizes = [32, 16], strides = [1, 1]} : vector<32x96xf32> to vector<32x16xf32>
    %18 = vector.shape_cast %17 : vector<32x16xf32> to vector<2x16x16xf32>
    %19 = arith.truncf %14 : vector<2x16x16xf32> to vector<2x16x16xbf16>
    %20 = arith.truncf %16 : vector<2x16x16xf32> to vector<2x16x16xbf16>
    "tpu.trace_start"() <{level = 10 : i32, message = "bqd,bkd->bqk"}> : () -> ()
    %cst_11 = arith.constant dense<0.000000e+00> : vector<2x16x16xf32>
    %21 = tpu.matmul %19, %20, %cst_11 {dimension_numbers = #tpu.dot_dimension_numbers<[2], [2], [1], [1], [0, 0, 0, 1, 1, 1], [0], [0]>} : vector<2x16x16xbf16>, vector<2x16x16xbf16>, vector<2x16x16xf32> -> vector<2x16x16xf32>
    "tpu.trace_stop"() : () -> ()
    %cst_12 = arith.constant 2.500000e-01 : f32
    %22 = vector.broadcast %cst_12 : f32 to vector<2x16x16xf32>
    %23 = arith.mulf %21, %22 : vector<2x16x16xf32>
    %24 = vector.shape_cast %1 : vector<16x16xf32> to vector<1x16x16xf32>
    %25 = vector.broadcast %24 : vector<1x16x16xf32> to vector<2x16x16xf32>
    %26 = arith.addf %23, %25 : vector<2x16x16xf32>
    %cst_13 = arith.constant dense<0xFF800000> : vector<2x16xf32>
    %27 = vector.multi_reduction <maximumf>, %26, %cst_13 [2] : vector<2x16x16xf32> to vector<2x16xf32>
    %28 = vector.shape_cast %27 : vector<2x16xf32> to vector<2x16x1xf32>
    %29 = vector.broadcast %28 : vector<2x16x1xf32> to vector<2x16x16xf32>
    %30 = arith.subf %26, %29 : vector<2x16x16xf32>
    %31 = math.exp %30 : vector<2x16x16xf32>
    %cst_14 = arith.constant dense<0.000000e+00> : vector<2x16xf32>
    %32 = vector.multi_reduction <add>, %31, %cst_14 [2] : vector<2x16x16xf32> to vector<2x16xf32>
    %33 = vector.shape_cast %32 : vector<2x16xf32> to vector<2x16x1xf32>
    %34 = tpu.reciprocal %33 {approx = true} : vector<2x16x1xf32> -> vector<2x16x1xf32>
    %35 = vector.broadcast %34 : vector<2x16x1xf32> to vector<2x16x16xf32>
    %36 = arith.mulf %31, %35 : vector<2x16x16xf32>
    %37 = arith.truncf %36 : vector<2x16x16xf32> to vector<2x16x16xbf16>
    %38 = arith.truncf %18 : vector<2x16x16xf32> to vector<2x16x16xbf16>
    "tpu.trace_start"() <{level = 10 : i32, message = "bqk,bkd->bqd"}> : () -> ()
    %cst_15 = arith.constant dense<0.000000e+00> : vector<2x16x16xf32>
    %39 = tpu.matmul %37, %38, %cst_15 {dimension_numbers = #tpu.dot_dimension_numbers<[2], [1], [1], [2], [0, 0, 0, 1, 1, 2], [0], [0]>} : vector<2x16x16xbf16>, vector<2x16x16xbf16>, vector<2x16x16xf32> -> vector<2x16x16xf32>
    "tpu.trace_stop"() : () -> ()
    %40 = vector.shape_cast %39 : vector<2x16x16xf32> to vector<32x16xf32>
    %41 = vector.extract_strided_slice %12 {offsets = [0, 16], sizes = [32, 16], strides = [1, 1]} : vector<32x96xf32> to vector<32x16xf32>
    %42 = vector.shape_cast %41 : vector<32x16xf32> to vector<2x16x16xf32>
    %43 = vector.extract_strided_slice %12 {offsets = [0, 48], sizes = [32, 16], strides = [1, 1]} : vector<32x96xf32> to vector<32x16xf32>
    %44 = vector.shape_cast %43 : vector<32x16xf32> to vector<2x16x16xf32>
    %45 = vector.extract_strided_slice %12 {offsets = [0, 80], sizes = [32, 16], strides = [1, 1]} : vector<32x96xf32> to vector<32x16xf32>
    %46 = vector.shape_cast %45 : vector<32x16xf32> to vector<2x16x16xf32>
    %47 = arith.truncf %42 : vector<2x16x16xf32> to vector<2x16x16xbf16>
    %48 = arith.truncf %44 : vector<2x16x16xf32> to vector<2x16x16xbf16>
    "tpu.trace_start"() <{level = 10 : i32, message = "bqd,bkd->bqk"}> : () -> ()
    %cst_16 = arith.constant dense<0.000000e+00> : vector<2x16x16xf32>
    %49 = tpu.matmul %47, %48, %cst_16 {dimension_numbers = #tpu.dot_dimension_numbers<[2], [2], [1], [1], [0, 0, 0, 1, 1, 1], [0], [0]>} : vector<2x16x16xbf16>, vector<2x16x16xbf16>, vector<2x16x16xf32> -> vector<2x16x16xf32>
    "tpu.trace_stop"() : () -> ()
    %cst_17 = arith.constant 2.500000e-01 : f32
    %50 = vector.broadcast %cst_17 : f32 to vector<2x16x16xf32>
    %51 = arith.mulf %49, %50 : vector<2x16x16xf32>
    %52 = vector.shape_cast %1 : vector<16x16xf32> to vector<1x16x16xf32>
    %53 = vector.broadcast %52 : vector<1x16x16xf32> to vector<2x16x16xf32>
    %54 = arith.addf %51, %53 : vector<2x16x16xf32>
    %cst_18 = arith.constant dense<0xFF800000> : vector<2x16xf32>
    %55 = vector.multi_reduction <maximumf>, %54, %cst_18 [2] : vector<2x16x16xf32> to vector<2x16xf32>
    %56 = vector.shape_cast %55 : vector<2x16xf32> to vector<2x16x1xf32>
    %57 = vector.broadcast %56 : vector<2x16x1xf32> to vector<2x16x16xf32>
    %58 = arith.subf %54, %57 : vector<2x16x16xf32>
    %59 = math.exp %58 : vector<2x16x16xf32>
    %cst_19 = arith.constant dense<0.000000e+00> : vector<2x16xf32>
    %60 = vector.multi_reduction <add>, %59, %cst_19 [2] : vector<2x16x16xf32> to vector<2x16xf32>
    %61 = vector.shape_cast %60 : vector<2x16xf32> to vector<2x16x1xf32>
    %62 = tpu.reciprocal %61 {approx = true} : vector<2x16x1xf32> -> vector<2x16x1xf32>
    %63 = vector.broadcast %62 : vector<2x16x1xf32> to vector<2x16x16xf32>
    %64 = arith.mulf %59, %63 : vector<2x16x16xf32>
    %65 = arith.truncf %64 : vector<2x16x16xf32> to vector<2x16x16xbf16>
    %66 = arith.truncf %46 : vector<2x16x16xf32> to vector<2x16x16xbf16>
    "tpu.trace_start"() <{level = 10 : i32, message = "bqk,bkd->bqd"}> : () -> ()
    %cst_20 = arith.constant dense<0.000000e+00> : vector<2x16x16xf32>
    %67 = tpu.matmul %65, %66, %cst_20 {dimension_numbers = #tpu.dot_dimension_numbers<[2], [1], [1], [2], [0, 0, 0, 1, 1, 2], [0], [0]>} : vector<2x16x16xbf16>, vector<2x16x16xbf16>, vector<2x16x16xf32> -> vector<2x16x16xf32>
    "tpu.trace_stop"() : () -> ()
    %68 = vector.shape_cast %67 : vector<2x16x16xf32> to vector<32x16xf32>
    %69 = tpu.concatenate %40, %68 in 1 : vector<32x16xf32>, vector<32x16xf32> -> vector<32x32xf32>
    %70 = arith.truncf %69 : vector<32x32xf32> to vector<32x32xbf16>
    %c80 = arith.constant 80 : index
    %c0_21 = arith.constant 0 : index
    %71 = vector.load %arg3[%c80, %c0_21] : memref<464x128xbf16, #tpu.memory_space<vmem>>, vector<32x32xbf16>
    %cst_22 = arith.constant dense<0.000000e+00> : vector<32x32xf32>
    %72 = tpu.matmul %70, %71, %cst_22 {dimension_numbers = #tpu.dot_dimension_numbers<[1], [0], [0], [1], [0, 0, 1, 1], [], []>} : vector<32x32xbf16>, vector<32x32xbf16>, vector<32x32xf32> -> vector<32x32xf32>
    %c1 = arith.constant 1 : index
    %c0_23 = arith.constant 0 : index
    %73 = vector.load %arg4[%c1, %c0_23] : memref<24x128xf32, #tpu.memory_space<vmem>>, vector<1x32xf32>
    %74 = vector.broadcast %73 : vector<1x32xf32> to vector<32x32xf32>
    %75 = arith.addf %72, %74 : vector<32x32xf32>
    %76 = arith.addf %6, %75 : vector<32x32xf32>
    %cst_24 = arith.constant dense<0.000000e+00> : vector<32xf32>
    %77 = vector.multi_reduction <add>, %76, %cst_24 [1] : vector<32x32xf32> to vector<32xf32>
    %78 = vector.shape_cast %77 : vector<32xf32> to vector<32x1xf32>
    %cst_25 = arith.constant 3.200000e+01 : f32
    %79 = vector.broadcast %cst_25 : f32 to vector<32x1xf32>
    %80 = arith.divf %78, %79 : vector<32x1xf32>
    %81 = vector.broadcast %80 : vector<32x1xf32> to vector<32x32xf32>
    %82 = arith.subf %76, %81 : vector<32x32xf32>
    %83 = arith.mulf %82, %82 : vector<32x32xf32>
    %cst_26 = arith.constant dense<0.000000e+00> : vector<32xf32>
    %84 = vector.multi_reduction <add>, %83, %cst_26 [1] : vector<32x32xf32> to vector<32xf32>
    %85 = vector.shape_cast %84 : vector<32xf32> to vector<32x1xf32>
    %cst_27 = arith.constant 3.200000e+01 : f32
    %86 = vector.broadcast %cst_27 : f32 to vector<32x1xf32>
    %87 = arith.divf %85, %86 : vector<32x1xf32>
    %88 = vector.broadcast %80 : vector<32x1xf32> to vector<32x32xf32>
    %89 = arith.subf %76, %88 : vector<32x32xf32>
    %cst_28 = arith.constant 9.99999974E-6 : f32
    %90 = vector.broadcast %cst_28 : f32 to vector<32x1xf32>
    %91 = arith.addf %87, %90 : vector<32x1xf32>
    %92 = math.rsqrt %91 : vector<32x1xf32>
    %93 = vector.broadcast %92 : vector<32x1xf32> to vector<32x32xf32>
    %94 = arith.mulf %89, %93 : vector<32x32xf32>
    %c2 = arith.constant 2 : index
    %c0_29 = arith.constant 0 : index
    %95 = vector.load %arg4[%c2, %c0_29] : memref<24x128xf32, #tpu.memory_space<vmem>>, vector<1x32xf32>
    %96 = vector.broadcast %95 : vector<1x32xf32> to vector<32x32xf32>
    %97 = arith.mulf %94, %96 : vector<32x32xf32>
    %c3 = arith.constant 3 : index
    %c0_30 = arith.constant 0 : index
    %98 = vector.load %arg4[%c3, %c0_30] : memref<24x128xf32, #tpu.memory_space<vmem>>, vector<1x32xf32>
    %99 = vector.broadcast %98 : vector<1x32xf32> to vector<32x32xf32>
    %100 = arith.addf %97, %99 : vector<32x32xf32>
    %101 = arith.truncf %100 : vector<32x32xf32> to vector<32x32xbf16>
    %c112 = arith.constant 112 : index
    %c0_31 = arith.constant 0 : index
    %102 = vector.load %arg3[%c112, %c0_31] : memref<464x128xbf16, #tpu.memory_space<vmem>>, vector<32x64xbf16>
    %cst_32 = arith.constant dense<0.000000e+00> : vector<32x64xf32>
    %103 = tpu.matmul %101, %102, %cst_32 {dimension_numbers = #tpu.dot_dimension_numbers<[1], [0], [0], [1], [0, 0, 1, 1], [], []>} : vector<32x32xbf16>, vector<32x64xbf16>, vector<32x64xf32> -> vector<32x64xf32>
    %c4 = arith.constant 4 : index
    %c0_33 = arith.constant 0 : index
    %104 = vector.load %arg4[%c4, %c0_33] : memref<24x128xf32, #tpu.memory_space<vmem>>, vector<1x64xf32>
    %105 = vector.broadcast %104 : vector<1x64xf32> to vector<32x64xf32>
    %106 = arith.addf %103, %105 : vector<32x64xf32>
    %cst_34 = arith.constant 0.000000e+00 : f32
    %107 = vector.broadcast %cst_34 : f32 to vector<32x64xf32>
    %108 = arith.maximumf %106, %107 : vector<32x64xf32>
    %109 = arith.truncf %108 : vector<32x64xf32> to vector<32x64xbf16>
    %c144 = arith.constant 144 : index
    %c0_35 = arith.constant 0 : index
    %110 = vector.load %arg3[%c144, %c0_35] : memref<464x128xbf16, #tpu.memory_space<vmem>>, vector<64x32xbf16>
    %cst_36 = arith.constant dense<0.000000e+00> : vector<32x32xf32>
    %111 = tpu.matmul %109, %110, %cst_36 {dimension_numbers = #tpu.dot_dimension_numbers<[1], [0], [0], [1], [0, 0, 1, 1], [], []>} : vector<32x64xbf16>, vector<64x32xbf16>, vector<32x32xf32> -> vector<32x32xf32>
    %c5 = arith.constant 5 : index
    %c0_37 = arith.constant 0 : index
    %112 = vector.load %arg4[%c5, %c0_37] : memref<24x128xf32, #tpu.memory_space<vmem>>, vector<1x32xf32>
    %113 = vector.broadcast %112 : vector<1x32xf32> to vector<32x32xf32>
    %114 = arith.addf %111, %113 : vector<32x32xf32>
    %115 = arith.addf %100, %114 : vector<32x32xf32>
    %cst_38 = arith.constant dense<0.000000e+00> : vector<32xf32>
    %116 = vector.multi_reduction <add>, %115, %cst_38 [1] : vector<32x32xf32> to vector<32xf32>
    %117 = vector.shape_cast %116 : vector<32xf32> to vector<32x1xf32>
    %cst_39 = arith.constant 3.200000e+01 : f32
    %118 = vector.broadcast %cst_39 : f32 to vector<32x1xf32>
    %119 = arith.divf %117, %118 : vector<32x1xf32>
    %120 = vector.broadcast %119 : vector<32x1xf32> to vector<32x32xf32>
    %121 = arith.subf %115, %120 : vector<32x32xf32>
    %122 = arith.mulf %121, %121 : vector<32x32xf32>
    %cst_40 = arith.constant dense<0.000000e+00> : vector<32xf32>
    %123 = vector.multi_reduction <add>, %122, %cst_40 [1] : vector<32x32xf32> to vector<32xf32>
    %124 = vector.shape_cast %123 : vector<32xf32> to vector<32x1xf32>
    %cst_41 = arith.constant 3.200000e+01 : f32
    %125 = vector.broadcast %cst_41 : f32 to vector<32x1xf32>
    %126 = arith.divf %124, %125 : vector<32x1xf32>
    %127 = vector.broadcast %119 : vector<32x1xf32> to vector<32x32xf32>
    %128 = arith.subf %115, %127 : vector<32x32xf32>
    %cst_42 = arith.constant 9.99999974E-6 : f32
    %129 = vector.broadcast %cst_42 : f32 to vector<32x1xf32>
    %130 = arith.addf %126, %129 : vector<32x1xf32>
    %131 = math.rsqrt %130 : vector<32x1xf32>
    %132 = vector.broadcast %131 : vector<32x1xf32> to vector<32x32xf32>
    %133 = arith.mulf %128, %132 : vector<32x32xf32>
    %c6 = arith.constant 6 : index
    %c0_43 = arith.constant 0 : index
    %134 = vector.load %arg4[%c6, %c0_43] : memref<24x128xf32, #tpu.memory_space<vmem>>, vector<1x32xf32>
    %135 = vector.broadcast %134 : vector<1x32xf32> to vector<32x32xf32>
    %136 = arith.mulf %133, %135 : vector<32x32xf32>
    %c7 = arith.constant 7 : index
    %c0_44 = arith.constant 0 : index
    %137 = vector.load %arg4[%c7, %c0_44] : memref<24x128xf32, #tpu.memory_space<vmem>>, vector<1x32xf32>
    %138 = vector.broadcast %137 : vector<1x32xf32> to vector<32x32xf32>
    %139 = arith.addf %136, %138 : vector<32x32xf32>
    %140 = arith.truncf %139 : vector<32x32xf32> to vector<32x32xbf16>
    %c208 = arith.constant 208 : index
    %c0_45 = arith.constant 0 : index
    %141 = vector.load %arg3[%c208, %c0_45] : memref<464x128xbf16, #tpu.memory_space<vmem>>, vector<32x96xbf16>
    %cst_46 = arith.constant dense<0.000000e+00> : vector<32x96xf32>
    %142 = tpu.matmul %140, %141, %cst_46 {dimension_numbers = #tpu.dot_dimension_numbers<[1], [0], [0], [1], [0, 0, 1, 1], [], []>} : vector<32x32xbf16>, vector<32x96xbf16>, vector<32x96xf32> -> vector<32x96xf32>
    %c8 = arith.constant 8 : index
    %c0_47 = arith.constant 0 : index
    %143 = vector.load %arg4[%c8, %c0_47] : memref<24x128xf32, #tpu.memory_space<vmem>>, vector<1x96xf32>
    %144 = vector.broadcast %143 : vector<1x96xf32> to vector<32x96xf32>
    %145 = arith.addf %142, %144 : vector<32x96xf32>
    %146 = vector.extract_strided_slice %145 {offsets = [0, 0], sizes = [32, 16], strides = [1, 1]} : vector<32x96xf32> to vector<32x16xf32>
    %147 = vector.shape_cast %146 : vector<32x16xf32> to vector<2x16x16xf32>
    %148 = vector.extract_strided_slice %145 {offsets = [0, 32], sizes = [32, 16], strides = [1, 1]} : vector<32x96xf32> to vector<32x16xf32>
    %149 = vector.shape_cast %148 : vector<32x16xf32> to vector<2x16x16xf32>
    %150 = vector.extract_strided_slice %145 {offsets = [0, 64], sizes = [32, 16], strides = [1, 1]} : vector<32x96xf32> to vector<32x16xf32>
    %151 = vector.shape_cast %150 : vector<32x16xf32> to vector<2x16x16xf32>
    %152 = arith.truncf %147 : vector<2x16x16xf32> to vector<2x16x16xbf16>
    %153 = arith.truncf %149 : vector<2x16x16xf32> to vector<2x16x16xbf16>
    "tpu.trace_start"() <{level = 10 : i32, message = "bqd,bkd->bqk"}> : () -> ()
    %cst_48 = arith.constant dense<0.000000e+00> : vector<2x16x16xf32>
    %154 = tpu.matmul %152, %153, %cst_48 {dimension_numbers = #tpu.dot_dimension_numbers<[2], [2], [1], [1], [0, 0, 0, 1, 1, 1], [0], [0]>} : vector<2x16x16xbf16>, vector<2x16x16xbf16>, vector<2x16x16xf32> -> vector<2x16x16xf32>
    "tpu.trace_stop"() : () -> ()
    %cst_49 = arith.constant 2.500000e-01 : f32
    %155 = vector.broadcast %cst_49 : f32 to vector<2x16x16xf32>
    %156 = arith.mulf %154, %155 : vector<2x16x16xf32>
    %157 = vector.shape_cast %1 : vector<16x16xf32> to vector<1x16x16xf32>
    %158 = vector.broadcast %157 : vector<1x16x16xf32> to vector<2x16x16xf32>
    %159 = arith.addf %156, %158 : vector<2x16x16xf32>
    %cst_50 = arith.constant dense<0xFF800000> : vector<2x16xf32>
    %160 = vector.multi_reduction <maximumf>, %159, %cst_50 [2] : vector<2x16x16xf32> to vector<2x16xf32>
    %161 = vector.shape_cast %160 : vector<2x16xf32> to vector<2x16x1xf32>
    %162 = vector.broadcast %161 : vector<2x16x1xf32> to vector<2x16x16xf32>
    %163 = arith.subf %159, %162 : vector<2x16x16xf32>
    %164 = math.exp %163 : vector<2x16x16xf32>
    %cst_51 = arith.constant dense<0.000000e+00> : vector<2x16xf32>
    %165 = vector.multi_reduction <add>, %164, %cst_51 [2] : vector<2x16x16xf32> to vector<2x16xf32>
    %166 = vector.shape_cast %165 : vector<2x16xf32> to vector<2x16x1xf32>
    %167 = tpu.reciprocal %166 {approx = true} : vector<2x16x1xf32> -> vector<2x16x1xf32>
    %168 = vector.broadcast %167 : vector<2x16x1xf32> to vector<2x16x16xf32>
    %169 = arith.mulf %164, %168 : vector<2x16x16xf32>
    %170 = arith.truncf %169 : vector<2x16x16xf32> to vector<2x16x16xbf16>
    %171 = arith.truncf %151 : vector<2x16x16xf32> to vector<2x16x16xbf16>
    "tpu.trace_start"() <{level = 10 : i32, message = "bqk,bkd->bqd"}> : () -> ()
    %cst_52 = arith.constant dense<0.000000e+00> : vector<2x16x16xf32>
    %172 = tpu.matmul %170, %171, %cst_52 {dimension_numbers = #tpu.dot_dimension_numbers<[2], [1], [1], [2], [0, 0, 0, 1, 1, 2], [0], [0]>} : vector<2x16x16xbf16>, vector<2x16x16xbf16>, vector<2x16x16xf32> -> vector<2x16x16xf32>
    "tpu.trace_stop"() : () -> ()
    %173 = vector.shape_cast %172 : vector<2x16x16xf32> to vector<32x16xf32>
    %174 = vector.extract_strided_slice %145 {offsets = [0, 16], sizes = [32, 16], strides = [1, 1]} : vector<32x96xf32> to vector<32x16xf32>
    %175 = vector.shape_cast %174 : vector<32x16xf32> to vector<2x16x16xf32>
    %176 = vector.extract_strided_slice %145 {offsets = [0, 48], sizes = [32, 16], strides = [1, 1]} : vector<32x96xf32> to vector<32x16xf32>
    %177 = vector.shape_cast %176 : vector<32x16xf32> to vector<2x16x16xf32>
    %178 = vector.extract_strided_slice %145 {offsets = [0, 80], sizes = [32, 16], strides = [1, 1]} : vector<32x96xf32> to vector<32x16xf32>
    %179 = vector.shape_cast %178 : vector<32x16xf32> to vector<2x16x16xf32>
    %180 = arith.truncf %175 : vector<2x16x16xf32> to vector<2x16x16xbf16>
    %181 = arith.truncf %177 : vector<2x16x16xf32> to vector<2x16x16xbf16>
    "tpu.trace_start"() <{level = 10 : i32, message = "bqd,bkd->bqk"}> : () -> ()
    %cst_53 = arith.constant dense<0.000000e+00> : vector<2x16x16xf32>
    %182 = tpu.matmul %180, %181, %cst_53 {dimension_numbers = #tpu.dot_dimension_numbers<[2], [2], [1], [1], [0, 0, 0, 1, 1, 1], [0], [0]>} : vector<2x16x16xbf16>, vector<2x16x16xbf16>, vector<2x16x16xf32> -> vector<2x16x16xf32>
    "tpu.trace_stop"() : () -> ()
    %cst_54 = arith.constant 2.500000e-01 : f32
    %183 = vector.broadcast %cst_54 : f32 to vector<2x16x16xf32>
    %184 = arith.mulf %182, %183 : vector<2x16x16xf32>
    %185 = vector.shape_cast %1 : vector<16x16xf32> to vector<1x16x16xf32>
    %186 = vector.broadcast %185 : vector<1x16x16xf32> to vector<2x16x16xf32>
    %187 = arith.addf %184, %186 : vector<2x16x16xf32>
    %cst_55 = arith.constant dense<0xFF800000> : vector<2x16xf32>
    %188 = vector.multi_reduction <maximumf>, %187, %cst_55 [2] : vector<2x16x16xf32> to vector<2x16xf32>
    %189 = vector.shape_cast %188 : vector<2x16xf32> to vector<2x16x1xf32>
    %190 = vector.broadcast %189 : vector<2x16x1xf32> to vector<2x16x16xf32>
    %191 = arith.subf %187, %190 : vector<2x16x16xf32>
    %192 = math.exp %191 : vector<2x16x16xf32>
    %cst_56 = arith.constant dense<0.000000e+00> : vector<2x16xf32>
    %193 = vector.multi_reduction <add>, %192, %cst_56 [2] : vector<2x16x16xf32> to vector<2x16xf32>
    %194 = vector.shape_cast %193 : vector<2x16xf32> to vector<2x16x1xf32>
    %195 = tpu.reciprocal %194 {approx = true} : vector<2x16x1xf32> -> vector<2x16x1xf32>
    %196 = vector.broadcast %195 : vector<2x16x1xf32> to vector<2x16x16xf32>
    %197 = arith.mulf %192, %196 : vector<2x16x16xf32>
    %198 = arith.truncf %197 : vector<2x16x16xf32> to vector<2x16x16xbf16>
    %199 = arith.truncf %179 : vector<2x16x16xf32> to vector<2x16x16xbf16>
    "tpu.trace_start"() <{level = 10 : i32, message = "bqk,bkd->bqd"}> : () -> ()
    %cst_57 = arith.constant dense<0.000000e+00> : vector<2x16x16xf32>
    %200 = tpu.matmul %198, %199, %cst_57 {dimension_numbers = #tpu.dot_dimension_numbers<[2], [1], [1], [2], [0, 0, 0, 1, 1, 2], [0], [0]>} : vector<2x16x16xbf16>, vector<2x16x16xbf16>, vector<2x16x16xf32> -> vector<2x16x16xf32>
    "tpu.trace_stop"() : () -> ()
    %201 = vector.shape_cast %200 : vector<2x16x16xf32> to vector<32x16xf32>
    %202 = tpu.concatenate %173, %201 in 1 : vector<32x16xf32>, vector<32x16xf32> -> vector<32x32xf32>
    %203 = arith.truncf %202 : vector<32x32xf32> to vector<32x32xbf16>
    %c240 = arith.constant 240 : index
    %c0_58 = arith.constant 0 : index
    %204 = vector.load %arg3[%c240, %c0_58] : memref<464x128xbf16, #tpu.memory_space<vmem>>, vector<32x32xbf16>
    %cst_59 = arith.constant dense<0.000000e+00> : vector<32x32xf32>
    %205 = tpu.matmul %203, %204, %cst_59 {dimension_numbers = #tpu.dot_dimension_numbers<[1], [0], [0], [1], [0, 0, 1, 1], [], []>} : vector<32x32xbf16>, vector<32x32xbf16>, vector<32x32xf32> -> vector<32x32xf32>
    %c9 = arith.constant 9 : index
    %c0_60 = arith.constant 0 : index
    %206 = vector.load %arg4[%c9, %c0_60] : memref<24x128xf32, #tpu.memory_space<vmem>>, vector<1x32xf32>
    %207 = vector.broadcast %206 : vector<1x32xf32> to vector<32x32xf32>
    %208 = arith.addf %205, %207 : vector<32x32xf32>
    %209 = arith.addf %139, %208 : vector<32x32xf32>
    %cst_61 = arith.constant dense<0.000000e+00> : vector<32xf32>
    %210 = vector.multi_reduction <add>, %209, %cst_61 [1] : vector<32x32xf32> to vector<32xf32>
    %211 = vector.shape_cast %210 : vector<32xf32> to vector<32x1xf32>
    %cst_62 = arith.constant 3.200000e+01 : f32
    %212 = vector.broadcast %cst_62 : f32 to vector<32x1xf32>
    %213 = arith.divf %211, %212 : vector<32x1xf32>
    %214 = vector.broadcast %213 : vector<32x1xf32> to vector<32x32xf32>
    %215 = arith.subf %209, %214 : vector<32x32xf32>
    %216 = arith.mulf %215, %215 : vector<32x32xf32>
    %cst_63 = arith.constant dense<0.000000e+00> : vector<32xf32>
    %217 = vector.multi_reduction <add>, %216, %cst_63 [1] : vector<32x32xf32> to vector<32xf32>
    %218 = vector.shape_cast %217 : vector<32xf32> to vector<32x1xf32>
    %cst_64 = arith.constant 3.200000e+01 : f32
    %219 = vector.broadcast %cst_64 : f32 to vector<32x1xf32>
    %220 = arith.divf %218, %219 : vector<32x1xf32>
    %221 = vector.broadcast %213 : vector<32x1xf32> to vector<32x32xf32>
    %222 = arith.subf %209, %221 : vector<32x32xf32>
    %cst_65 = arith.constant 9.99999974E-6 : f32
    %223 = vector.broadcast %cst_65 : f32 to vector<32x1xf32>
    %224 = arith.addf %220, %223 : vector<32x1xf32>
    %225 = math.rsqrt %224 : vector<32x1xf32>
    %226 = vector.broadcast %225 : vector<32x1xf32> to vector<32x32xf32>
    %227 = arith.mulf %222, %226 : vector<32x32xf32>
    %c10 = arith.constant 10 : index
    %c0_66 = arith.constant 0 : index
    %228 = vector.load %arg4[%c10, %c0_66] : memref<24x128xf32, #tpu.memory_space<vmem>>, vector<1x32xf32>
    %229 = vector.broadcast %228 : vector<1x32xf32> to vector<32x32xf32>
    %230 = arith.mulf %227, %229 : vector<32x32xf32>
    %c11 = arith.constant 11 : index
    %c0_67 = arith.constant 0 : index
    %231 = vector.load %arg4[%c11, %c0_67] : memref<24x128xf32, #tpu.memory_space<vmem>>, vector<1x32xf32>
    %232 = vector.broadcast %231 : vector<1x32xf32> to vector<32x32xf32>
    %233 = arith.addf %230, %232 : vector<32x32xf32>
    %234 = arith.truncf %233 : vector<32x32xf32> to vector<32x32xbf16>
    %c272 = arith.constant 272 : index
    %c0_68 = arith.constant 0 : index
    %235 = vector.load %arg3[%c272, %c0_68] : memref<464x128xbf16, #tpu.memory_space<vmem>>, vector<32x64xbf16>
    %cst_69 = arith.constant dense<0.000000e+00> : vector<32x64xf32>
    %236 = tpu.matmul %234, %235, %cst_69 {dimension_numbers = #tpu.dot_dimension_numbers<[1], [0], [0], [1], [0, 0, 1, 1], [], []>} : vector<32x32xbf16>, vector<32x64xbf16>, vector<32x64xf32> -> vector<32x64xf32>
    %c12 = arith.constant 12 : index
    %c0_70 = arith.constant 0 : index
    %237 = vector.load %arg4[%c12, %c0_70] : memref<24x128xf32, #tpu.memory_space<vmem>>, vector<1x64xf32>
    %238 = vector.broadcast %237 : vector<1x64xf32> to vector<32x64xf32>
    %239 = arith.addf %236, %238 : vector<32x64xf32>
    %cst_71 = arith.constant 0.000000e+00 : f32
    %240 = vector.broadcast %cst_71 : f32 to vector<32x64xf32>
    %241 = arith.maximumf %239, %240 : vector<32x64xf32>
    %242 = arith.truncf %241 : vector<32x64xf32> to vector<32x64xbf16>
    %c304 = arith.constant 304 : index
    %c0_72 = arith.constant 0 : index
    %243 = vector.load %arg3[%c304, %c0_72] : memref<464x128xbf16, #tpu.memory_space<vmem>>, vector<64x32xbf16>
    %cst_73 = arith.constant dense<0.000000e+00> : vector<32x32xf32>
    %244 = tpu.matmul %242, %243, %cst_73 {dimension_numbers = #tpu.dot_dimension_numbers<[1], [0], [0], [1], [0, 0, 1, 1], [], []>} : vector<32x64xbf16>, vector<64x32xbf16>, vector<32x32xf32> -> vector<32x32xf32>
    %c13 = arith.constant 13 : index
    %c0_74 = arith.constant 0 : index
    %245 = vector.load %arg4[%c13, %c0_74] : memref<24x128xf32, #tpu.memory_space<vmem>>, vector<1x32xf32>
    %246 = vector.broadcast %245 : vector<1x32xf32> to vector<32x32xf32>
    %247 = arith.addf %244, %246 : vector<32x32xf32>
    %248 = arith.addf %233, %247 : vector<32x32xf32>
    %cst_75 = arith.constant dense<0.000000e+00> : vector<32xf32>
    %249 = vector.multi_reduction <add>, %248, %cst_75 [1] : vector<32x32xf32> to vector<32xf32>
    %250 = vector.shape_cast %249 : vector<32xf32> to vector<32x1xf32>
    %cst_76 = arith.constant 3.200000e+01 : f32
    %251 = vector.broadcast %cst_76 : f32 to vector<32x1xf32>
    %252 = arith.divf %250, %251 : vector<32x1xf32>
    %253 = vector.broadcast %252 : vector<32x1xf32> to vector<32x32xf32>
    %254 = arith.subf %248, %253 : vector<32x32xf32>
    %255 = arith.mulf %254, %254 : vector<32x32xf32>
    %cst_77 = arith.constant dense<0.000000e+00> : vector<32xf32>
    %256 = vector.multi_reduction <add>, %255, %cst_77 [1] : vector<32x32xf32> to vector<32xf32>
    %257 = vector.shape_cast %256 : vector<32xf32> to vector<32x1xf32>
    %cst_78 = arith.constant 3.200000e+01 : f32
    %258 = vector.broadcast %cst_78 : f32 to vector<32x1xf32>
    %259 = arith.divf %257, %258 : vector<32x1xf32>
    %260 = vector.broadcast %252 : vector<32x1xf32> to vector<32x32xf32>
    %261 = arith.subf %248, %260 : vector<32x32xf32>
    %cst_79 = arith.constant 9.99999974E-6 : f32
    %262 = vector.broadcast %cst_79 : f32 to vector<32x1xf32>
    %263 = arith.addf %259, %262 : vector<32x1xf32>
    %264 = math.rsqrt %263 : vector<32x1xf32>
    %265 = vector.broadcast %264 : vector<32x1xf32> to vector<32x32xf32>
    %266 = arith.mulf %261, %265 : vector<32x32xf32>
    %c14 = arith.constant 14 : index
    %c0_80 = arith.constant 0 : index
    %267 = vector.load %arg4[%c14, %c0_80] : memref<24x128xf32, #tpu.memory_space<vmem>>, vector<1x32xf32>
    %268 = vector.broadcast %267 : vector<1x32xf32> to vector<32x32xf32>
    %269 = arith.mulf %266, %268 : vector<32x32xf32>
    %c15 = arith.constant 15 : index
    %c0_81 = arith.constant 0 : index
    %270 = vector.load %arg4[%c15, %c0_81] : memref<24x128xf32, #tpu.memory_space<vmem>>, vector<1x32xf32>
    %271 = vector.broadcast %270 : vector<1x32xf32> to vector<32x32xf32>
    %272 = arith.addf %269, %271 : vector<32x32xf32>
    %273 = arith.truncf %272 : vector<32x32xf32> to vector<32x32xbf16>
    %c368 = arith.constant 368 : index
    %c0_82 = arith.constant 0 : index
    %274 = vector.load %arg3[%c368, %c0_82] : memref<464x128xbf16, #tpu.memory_space<vmem>>, vector<32x64xbf16>
    %cst_83 = arith.constant dense<0.000000e+00> : vector<32x64xf32>
    %275 = tpu.matmul %273, %274, %cst_83 {dimension_numbers = #tpu.dot_dimension_numbers<[1], [0], [0], [1], [0, 0, 1, 1], [], []>} : vector<32x32xbf16>, vector<32x64xbf16>, vector<32x64xf32> -> vector<32x64xf32>
    %c16 = arith.constant 16 : index
    %c0_84 = arith.constant 0 : index
    %276 = vector.load %arg4[%c16, %c0_84] : memref<24x128xf32, #tpu.memory_space<vmem>>, vector<1x64xf32>
    %277 = vector.broadcast %276 : vector<1x64xf32> to vector<32x64xf32>
    %278 = arith.addf %275, %277 : vector<32x64xf32>
    %cst_85 = arith.constant 0.000000e+00 : f32
    %279 = vector.broadcast %cst_85 : f32 to vector<32x64xf32>
    %280 = arith.maximumf %278, %279 : vector<32x64xf32>
    %281 = arith.truncf %280 : vector<32x64xf32> to vector<32x64xbf16>
    %c400 = arith.constant 400 : index
    %c0_86 = arith.constant 0 : index
    %282 = vector.load %arg3[%c400, %c0_86] : memref<464x128xbf16, #tpu.memory_space<vmem>>, vector<64x4xbf16>
    %cst_87 = arith.constant dense<0.000000e+00> : vector<32x4xf32>
    %283 = tpu.matmul %281, %282, %cst_87 {dimension_numbers = #tpu.dot_dimension_numbers<[1], [0], [0], [1], [0, 0, 1, 1], [], []>} : vector<32x64xbf16>, vector<64x4xbf16>, vector<32x4xf32> -> vector<32x4xf32>
    %c17 = arith.constant 17 : index
    %c0_88 = arith.constant 0 : index
    %284 = vector.load %arg4[%c17, %c0_88] : memref<24x128xf32, #tpu.memory_space<vmem>>, vector<1x4xf32>
    %285 = vector.broadcast %284 : vector<1x4xf32> to vector<32x4xf32>
    %286 = arith.addf %283, %285 : vector<32x4xf32>
    %c0_89 = arith.constant 0 : index
    %c0_90 = arith.constant 0 : index
    %c0_91 = arith.constant 0 : index
    %287 = vector.load %arg5[%c0_89, %c0_90, %c0_91] : memref<1x32x4xf32, #tpu.memory_space<vmem>>, vector<1x32x4xf32>
    %288 = vector.shape_cast %287 : vector<1x32x4xf32> to vector<32x4xf32>
    %289 = vector.shape_cast %286 : vector<32x4xf32> to vector<1x32x4xf32>
    tpu.vector_store %arg5[%c0_89, %c0_90, %c0_91], %289 {strides = array<i32>} : memref<1x32x4xf32, #tpu.memory_space<vmem>>, vector<1x32x4xf32>,
    return
  }
  func.func @transform_0(%arg0: i32) -> (i32, i32, i32) {
    %c0_i32 = arith.constant 0 : i32
    %c0_i32_0 = arith.constant 0 : i32
    %c0_i32_1 = arith.constant 0 : i32
    return %arg0, %c0_i32, %c0_i32_0 : i32, i32, i32
  }
  func.func @transform_1(%arg0: i32) -> (i32, i32, i32) {
    %c0_i32 = arith.constant 0 : i32
    %c0_i32_0 = arith.constant 0 : i32
    %c0_i32_1 = arith.constant 0 : i32
    return %arg0, %c0_i32, %c0_i32_0 : i32, i32, i32
  }
  func.func @transform_2(%arg0: i32) -> (i32, i32) {
    %c0_i32 = arith.constant 0 : i32
    %c0_i32_0 = arith.constant 0 : i32
    %c0_i32_1 = arith.constant 0 : i32
    return %c0_i32, %c0_i32_0 : i32, i32
  }
  func.func @transform_3(%arg0: i32) -> (i32, i32) {
    %c0_i32 = arith.constant 0 : i32
    %c0_i32_0 = arith.constant 0 : i32
    %c0_i32_1 = arith.constant 0 : i32
    return %c0_i32, %c0_i32_0 : i32, i32
  }
  func.func @transform_4(%arg0: i32) -> (i32, i32, i32) {
    %c0_i32 = arith.constant 0 : i32
    %c0_i32_0 = arith.constant 0 : i32
    %c0_i32_1 = arith.constant 0 : i32
    return %arg0, %c0_i32, %c0_i32_0 : i32, i32, i32
  }
}

</mosaic_0001>

<llo_original>
// kernel: nrtsi_imputer_forward.1
$region0: #{nrtsi_imputer_forward.1}
  #allocation0 [shape = 'u32[]', space=smem, size = 0x4, offset = 0x4, fixed_abs, tag = 'smem constant byte address 0x4 - core index']
  #allocation1 [shape = 'u32[144,128]{1,0:T(1,128)}', space=vmem, size = 0x12000, scoped, tag = 'internal scratch']
  %s0 = inlined_call_operand.vmem [shape: f32[1,32,40], index: 0, kind: input, shape index: {}]
  %s1 = inlined_call_operand.vmem [shape: f32[1,16,16], index: 1, kind: input, shape index: {}]
  %s2 = inlined_call_operand.vmem [shape: bf16[464,128], index: 2, kind: input, shape index: {}]
  %s3 = inlined_call_operand.vmem [shape: f32[24,128], index: 3, kind: input, shape index: {}]
  %s4 = inlined_call_operand.vmem [shape: f32[1,32,4], index: 4, kind: output, shape index: {}]
  %s5 = sld [smem:[#allocation0]]
  $region26: #{nrtsi_imputer_forward.1} parent=0
    _
  %s7 = ssub.s32 1, %s5
  %s8 = scalar_select 0, %s7, %s5
  // Predicated region
  $region2: #{nrtsi_imputer_forward.1} parent=0 // pred_check
    _
  $region3: #{nrtsi_imputer_forward.1} parent=0 // pred_check_branch
    %10 = sbr.rel (0) target = $region5
  $region4: #{nrtsi_imputer_forward.1} parent=0 // pred_region
    _
  $region5: #{nrtsi_imputer_forward.1} parent=0 // pred_fallthru
    _
  // Predicated region
  $region6: #{nrtsi_imputer_forward.1} parent=0 // pred_check
    _
  $region7: #{nrtsi_imputer_forward.1} parent=0 // pred_check_branch
    %12 = sbr.rel (0) target = $region9
  $region8: #{nrtsi_imputer_forward.1} parent=0 // pred_region
    _
  $region9: #{nrtsi_imputer_forward.1} parent=0 // pred_fallthru
    _
  // Predicated region
  $region10: #{nrtsi_imputer_forward.1} parent=0 // pred_check
    _
  $region11: #{nrtsi_imputer_forward.1} parent=0 // pred_check_branch
    %14 = sbr.rel (0) target = $region13
  $region12: #{nrtsi_imputer_forward.1} parent=0 // pred_region
    _
  $region13: #{nrtsi_imputer_forward.1} parent=0 // pred_fallthru
    _
  // Predicated region
  $region14: #{nrtsi_imputer_forward.1} parent=0 // pred_check
    _
  $region15: #{nrtsi_imputer_forward.1} parent=0 // pred_check_branch
    %16 = sbr.rel (0) target = $region17
  $region16: #{nrtsi_imputer_forward.1} parent=0 // pred_region
    _
  $region17: #{nrtsi_imputer_forward.1} parent=0 // pred_fallthru
    _
  %v18 = vld [vmem:[%s1] sm:$0xff]
  %v19 = vld [vmem:[%s1 + $0x8] sm:$0xff]
  %v20 = vld [vmem:[%s0] sm:$0xff]
  %v21 = vld [vmem:[%s0 + $0x8] sm:$0xff]
  %v22 = vld [vmem:[%s0 + $0x10] sm:$0xff]
  %v23 = vld [vmem:[%s0 + $0x18] sm:$0xff]
  %v24 = vpack.c.bf16 %v21, %v20
  %v25 = vpack.c.bf16 %v23, %v22
  %v26 = vld [vmem:[%s2] sm:$0xf]
  %v27 = vld [vmem:[%s2 + $0x4] sm:$0xf]
  %v28 = vld [vmem:[%s2 + $0x8] sm:$0xf]
  %v29 = vld [vmem:[%s2 + $0xc] sm:$0xf]
  %v30 = vld [vmem:[%s2 + $0x10] sm:$0xf]
  %v36 = vunpack.c.l.b16 %v26
  %v37 = vunpack.c.l.b16 %v27
  %v38 = vunpack.c.l.b16 %v28
  %v39 = vunpack.c.l.b16 %v29
  %v40 = vunpack.c.l.b16 %v30
  %v41 = vpack.c.b16 %v37, %v36
  %v42 = vpack.c.b16 %v39, %v38
  %v43 = vpack.c.b16 %v40, %v40
  %vm46 = vcmask 326656
  %v48 = vsel %vm46, %v24, 0
  %v51 = vsel %vm46, %v25, 0
  %vm53 = vcmask 1043456
  %v55 = vsel %vm53, %v43, 0
  %57 = vmatprep.subr.bf16.mxu0 0
  %58 = vmatpush1.bf16.msra.mxu0 %v41
  %59 = vmatprep.subr.bf16.mxu0 0
  %60 = vmatpush1.bf16.msra.mxu0 %v42
  %61 = vmatprep.subr.bf16.mxu0 0
  %62 = vmatpush1.bf16.msra.mxu0 %v55
  %63 = vmatprep.subr.bf16.mxu0 0
  %64 = vmatpush1.bf16.msra.mxu0 0
  %65 = vmatprep.subr.bf16.mxu0 0
  %66 = vmatpush1.bf16.msra.mxu0 0
  %67 = vmatprep.subr.bf16.mxu0 0
  %68 = vmatpush1.bf16.msra.mxu0 0
  %69 = vmatprep.subr.bf16.mxu0 0
  %70 = vmatpush1.bf16.msra.mxu0 0
  %71 = vmatprep.subr.bf16.mxu0 0
  %72 = vmatpush1.bf16.msra.mxu0 0
  %73 = vmatprep.subr.bf16.mxu0 0
  %74 = vmatpush1.bf16.msra.mxu0 0
  %75 = vmatprep.subr.bf16.mxu0 0
  %76 = vmatpush1.bf16.msra.mxu0 0
  %77 = vmatprep.subr.bf16.mxu0 0
  %78 = vmatpush1.bf16.msra.mxu0 0
  %79 = vmatprep.subr.bf16.mxu0 0
  %80 = vmatpush1.bf16.msra.mxu0 0
  %81 = vmatprep.subr.bf16.mxu0 0
  %82 = vmatpush1.bf16.msra.mxu0 0
  %83 = vmatprep.subr.bf16.mxu0 0
  %84 = vmatpush1.bf16.msra.mxu0 0
  %85 = vmatprep.subr.bf16.mxu0 0
  %86 = vmatpush1.bf16.msra.mxu0 0
  %87 = vmatprep.subr.bf16.mxu0 0
  %88 = vmatpush1.bf16.msra.mxu0 0
  %89 = vmatprep.mubr.bf16.mxu0 0
  %90 = vmatmul.mubr.bf16.gmra.mrb[0].mxu0 %v48
  %v91 = vpop.f32.mrb[0].mxu0
  %v92 = vadd.f32 0.0, %v91
  %v93 = vpop.f32.mrb[0].mxu0
  %v94 = vpop.f32.mrb[0].mxu0
  %v95 = vadd.f32 0.0, %v94
  %v96 = vpop.f32.mrb[0].mxu0
  %97 = vmatprep.mubr.bf16.mxu0 0
  %98 = vmatmul.mubr.bf16.gmra.mrb[0].mxu0 %v51
  %v99 = vpop.f32.mrb[0].mxu0
  %v100 = vadd.f32 0.0, %v99
  %v101 = vpop.f32.mrb[0].mxu0
  %v102 = vpop.f32.mrb[0].mxu0
  %v103 = vadd.f32 0.0, %v102
  %v104 = vpop.f32.mrb[0].mxu0
  %105 = vdwg.mxu0
  %v106 = vpack.c.bf16 %v95, %v92
  %v107 = vpack.c.bf16 %v103, %v100
  %v108 = vld [vmem:[%s2 + $0x18] sm:$0xf]
  %v109 = vld [vmem:[%s2 + $0x1c] sm:$0xf]
  %v110 = vld [vmem:[%s2 + $0x20] sm:$0xf]
  %v111 = vld [vmem:[%s2 + $0x24] sm:$0xf]
  %v112 = vld [vmem:[%s3] sm:$0x1]
  %v113 = vlaneseq
  %v114 = vshrl.u32 %v113, 7
  %v115 = vsub.s32 0, %v114
  %v116 = vrot.slane %v112, %v115
  %v121 = vunpack.c.l.b16 %v108
  %v122 = vunpack.c.l.b16 %v109
  %v123 = vunpack.c.l.b16 %v110
  %v124 = vunpack.c.l.b16 %v111
  %v125 = vpack.c.b16 %v122, %v121
  %v126 = vpack.c.b16 %v124, %v123
  %vm129 = vcmask 261120
  %v131 = vsel %vm129, %v106, 0
  %v134 = vsel %vm129, %v107, 0
  %136 = vmatprep.subr.bf16.mxu0 0
  %137 = vmatpush1.bf16.msra.mxu0 %v125
  %138 = vmatprep.subr.bf16.mxu0 0
  %139 = vmatpush1.bf16.msra.mxu0 %v126
  %140 = vmatprep.subr.bf16.mxu0 0
  %141 = vmatpush1.bf16.msra.mxu0 0
  %142 = vmatprep.subr.bf16.mxu0 0
  %143 = vmatpush1.bf16.msra.mxu0 0
  %144 = vmatprep.subr.bf16.mxu0 0
  %145 = vmatpush1.bf16.msra.mxu0 0
  %146 = vmatprep.subr.bf16.mxu0 0
  %147 = vmatpush1.bf16.msra.mxu0 0
  %148 = vmatprep.subr.bf16.mxu0 0
  %149 = vmatpush1.bf16.msra.mxu0 0
  %150 = vmatprep.subr.bf16.mxu0 0
  %151 = vmatpush1.bf16.msra.mxu0 0
  %152 = vmatprep.subr.bf16.mxu0 0
  %153 = vmatpush1.bf16.msra.mxu0 0
  %154 = vmatprep.subr.bf16.mxu0 0
  %155 = vmatpush1.bf16.msra.mxu0 0
  %156 = vmatprep.subr.bf16.mxu0 0
  %157 = vmatpush1.bf16.msra.mxu0 0
  %158 = vmatprep.subr.bf16.mxu0 0
  %159 = vmatpush1.bf16.msra.mxu0 0
  %160 = vmatprep.subr.bf16.mxu0 0
  %161 = vmatpush1.bf16.msra.mxu0 0
  %162 = vmatprep.subr.bf16.mxu0 0
  %163 = vmatpush1.bf16.msra.mxu0 0
  %164 = vmatprep.subr.bf16.mxu0 0
  %165 = vmatpush1.bf16.msra.mxu0 0
  %166 = vmatprep.subr.bf16.mxu0 0
  %167 = vmatpush1.bf16.msra.mxu0 0
  %168 = vmatprep.mubr.bf16.mxu0 0
  %169 = vmatmul.mubr.bf16.gmra.mrb[0].mxu0 %v131
  %v170 = vpop.f32.mrb[0].mxu0
  %v171 = vadd.f32 %v116, %v170
  %v172 = vpop.f32.mrb[0].mxu0
  %v173 = vpop.f32.mrb[0].mxu0
  %v174 = vadd.f32 %v116, %v173
  %v175 = vpop.f32.mrb[0].mxu0
  %176 = vmatprep.mubr.bf16.mxu0 0
  %177 = vmatmul.mubr.bf16.gmra.mrb[0].mxu0 %v134
  %v178 = vpop.f32.mrb[0].mxu0
  %v179 = vadd.f32 %v116, %v178
  %v180 = vpop.f32.mrb[0].mxu0
  %v181 = vpop.f32.mrb[0].mxu0
  %v182 = vadd.f32 %v116, %v181
  %v183 = vpop.f32.mrb[0].mxu0
  %184 = vdwg.mxu0
  %v185 = vpack.c.bf16 %v174, %v171
  %v186 = vpack.c.bf16 %v182, %v179
  %188 = vrot.lane.b32.xlu0 %v185, 96
  %v189 = vpop.permute.xlu0 %188
  %vm190 = vcmask 130048
  %v192 = vsel %vm190, %v185, 0
  %v195 = vsel %vm190, %v189, 0
  %197 = vmatprep.subr.bf16.mxu0 0
  %198 = vmatpush1.bf16.xpose.msra.mxu0 %v195
  %199 = vmatprep.subr.bf16.mxu0 0
  %200 = vmatpush1.bf16.xpose.msra.mxu0 0
  %201 = vmatprep.subr.bf16.mxu0 0
  %202 = vmatpush1.bf16.xpose.msra.mxu0 0
  %203 = vmatprep.subr.bf16.mxu0 0
  %204 = vmatpush1.bf16.xpose.msra.mxu0 0
  %205 = vmatprep.subr.bf16.mxu0 0
  %206 = vmatpush1.bf16.xpose.msra.mxu0 0
  %207 = vmatprep.subr.bf16.mxu0 0
  %208 = vmatpush1.bf16.xpose.msra.mxu0 0
  %209 = vmatprep.subr.bf16.mxu0 0
  %210 = vmatpush1.bf16.xpose.msra.mxu0 0
  %211 = vmatprep.subr.bf16.mxu0 0
  %212 = vmatpush1.bf16.xpose.msra.mxu0 0
  %213 = vmatprep.subr.bf16.mxu0 0
  %214 = vmatpush1.bf16.xpose.msra.mxu0 0
  %215 = vmatprep.subr.bf16.mxu0 0
  %216 = vmatpush1.bf16.xpose.msra.mxu0 0
  %217 = vmatprep.subr.bf16.mxu0 0
  %218 = vmatpush1.bf16.xpose.msra.mxu0 0
  %219 = vmatprep.subr.bf16.mxu0 0
  %220 = vmatpush1.bf16.xpose.msra.mxu0 0
  %221 = vmatprep.subr.bf16.mxu0 0
  %222 = vmatpush1.bf16.xpose.msra.mxu0 0
  %223 = vmatprep.subr.bf16.mxu0 0
  %224 = vmatpush1.bf16.xpose.msra.mxu0 0
  %225 = vmatprep.subr.bf16.mxu0 0
  %226 = vmatpush1.bf16.xpose.msra.mxu0 0
  %227 = vmatprep.subr.bf16.mxu0 0
  %228 = vmatpush1.bf16.xpose.msra.mxu0 0
  %229 = vmatprep.mubr.bf16.mxu0 0
  %230 = vmatmul.mubr.bf16.gmra.mrb[0].mxu0 %v192
  %v231 = vpop.f32.mrb[0].mxu0
  %v232 = vadd.f32 0.0, %v231
  %v233 = vpop.f32.mrb[0].mxu0
  %v234 = vpop.f32.mrb[0].mxu0
  %v235 = vadd.f32 0.0, %v234
  %v236 = vpop.f32.mrb[0].mxu0
  %237 = vdwg.mxu0
  %239 = vrot.lane.b32.xlu0 %v186, 96
  %v240 = vpop.permute.xlu0 %239
  %v242 = vsel %vm190, %v186, 0
  %v245 = vsel %vm190, %v240, 0
  %247 = vmatprep.subr.bf16.mxu0 0
  %248 = vmatpush1.bf16.xpose.msra.mxu0 %v245
  %249 = vmatprep.subr.bf16.mxu0 0
  %250 = vmatpush1.bf16.xpose.msra.mxu0 0
  %251 = vmatprep.subr.bf16.mxu0 0
  %252 = vmatpush1.bf16.xpose.msra.mxu0 0
  %253 = vmatprep.subr.bf16.mxu0 0
  %254 = vmatpush1.bf16.xpose.msra.mxu0 0
  %255 = vmatprep.subr.bf16.mxu0 0
  %256 = vmatpush1.bf16.xpose.msra.mxu0 0
  %257 = vmatprep.subr.bf16.mxu0 0
  %258 = vmatpush1.bf16.xpose.msra.mxu0 0
  %259 = vmatprep.subr.bf16.mxu0 0
  %260 = vmatpush1.bf16.xpose.msra.mxu0 0
  %261 = vmatprep.subr.bf16.mxu0 0
  %262 = vmatpush1.bf16.xpose.msra.mxu0 0
  %263 = vmatprep.subr.bf16.mxu0 0
  %264 = vmatpush1.bf16.xpose.msra.mxu0 0
  %265 = vmatprep.subr.bf16.mxu0 0
  %266 = vmatpush1.bf16.xpose.msra.mxu0 0
  %267 = vmatprep.subr.bf16.mxu0 0
  %268 = vmatpush1.bf16.xpose.msra.mxu0 0
  %269 = vmatprep.subr.bf16.mxu0 0
  %270 = vmatpush1.bf16.xpose.msra.mxu0 0
  %271 = vmatprep.subr.bf16.mxu0 0
  %272 = vmatpush1.bf16.xpose.msra.mxu0 0
  %273 = vmatprep.subr.bf16.mxu0 0
  %274 = vmatpush1.bf16.xpose.msra.mxu0 0
  %275 = vmatprep.subr.bf16.mxu0 0
  %276 = vmatpush1.bf16.xpose.msra.mxu0 0
  %277 = vmatprep.subr.bf16.mxu0 0
  %278 = vmatpush1.bf16.xpose.msra.mxu0 0
  %279 = vmatprep.mubr.bf16.mxu0 0
  %280 = vmatmul.mubr.bf16.gmra.mrb[0].mxu0 %v242
  %v281 = vpop.f32.mrb[0].mxu0
  %v282 = vadd.f32 0.0, %v281
  %v283 = vpop.f32.mrb[0].mxu0
  %v284 = vpop.f32.mrb[0].mxu0
  %v285 = vadd.f32 0.0, %v284
  %v286 = vpop.f32.mrb[0].mxu0
  %287 = vdwg.mxu0
  %v288 = vmul.f32 %v232, 0.25
  %v289 = vmul.f32 %v235, 0.25
  %v290 = vmul.f32 %v282, 0.25
  %v291 = vmul.f32 %v285, 0.25
  %v292 = vadd.f32 %v288, %v18
  %v293 = vadd.f32 %v289, %v19
  %v294 = vadd.f32 %v290, %v18
  %v295 = vadd.f32 %v291, %v19
  %v296 = vsel %vm190, %v292, -inf
  %297 = vmax.xlane.f32.xlu0 %v296
  %v298 = vpop.xlane.xlu0 %297
  %v299 = vsel %vm190, %v293, -inf
  %300 = vmax.xlane.f32.xlu0 %v299
  %v301 = vpop.xlane.xlu0 %300
  %v302 = vsel %vm190, %v294, -inf
  %303 = vmax.xlane.f32.xlu0 %v302
  %v304 = vpop.xlane.xlu0 %303
  %v305 = vsel %vm190, %v295, -inf
  %306 = vmax.xlane.f32.xlu0 %v305
  %v307 = vpop.xlane.xlu0 %306
  %v308 = vsub.f32 %v292, %v298
  %v309 = vsub.f32 %v293, %v301
  %v310 = vsub.f32 %v294, %v304
  %v311 = vsub.f32 %v295, %v307
  %v312 = vmul.f32 %v308, 1.442695
  %v313 = vpow.pop %v312
  %v314 = vmul.f32 %v309, 1.442695
  %v315 = vpow.pop %v314
  %v316 = vmul.f32 %v310, 1.442695
  %v317 = vpow.pop %v316
  %v318 = vmul.f32 %v311, 1.442695
  %v319 = vpow.pop %v318
  %v320 = vsel %vm190, %v313, 0.0
  %321 = vadd.xlane.f32.xlu0 %v320
  %v322 = vpop.xlane.xlu0 %321
  %v323 = vsel %vm190, %v315, 0.0
  %324 = vadd.xlane.f32.xlu0 %v323
  %v325 = vpop.xlane.xlu0 %324
  %v326 = vsel %vm190, %v317, 0.0
  %327 = vadd.xlane.f32.xlu0 %v326
  %v328 = vpop.xlane.xlu0 %327
  %v329 = vsel %vm190, %v319, 0.0
  %330 = vadd.xlane.f32.xlu0 %v329
  %v331 = vpop.xlane.xlu0 %330
  %v332 = vrcp.pop %v322
  %v333 = vrcp.pop %v325
  %v334 = vrcp.pop %v328
  %v335 = vrcp.pop %v331
  %v336 = vmul.f32 %v313, %v332
  %v337 = vmul.f32 %v315, %v333
  %v338 = vmul.f32 %v317, %v334
  %v339 = vmul.f32 %v319, %v335
  %v340 = vpack.c.bf16 %v337, %v336
  %v341 = vpack.c.bf16 %v339, %v338
  %342 = vrot.lane.b32.xlu0 %v185, 64
  %v343 = vpop.permute.xlu0 %342
  %v346 = vsel %vm190, %v340, 0
  %348 = vmatprep.subr.bf16.mxu0 0
  %349 = vmatpush1.bf16.msra.mxu0 %v343
  %350 = vmatprep.subr.bf16.mxu0 0
  %351 = vmatpush1.bf16.msra.mxu0 0
  %352 = vmatprep.subr.bf16.mxu0 0
  %353 = vmatpush1.bf16.msra.mxu0 0
  %354 = vmatprep.subr.bf16.mxu0 0
  %355 = vmatpush1.bf16.msra.mxu0 0
  %356 = vmatprep.subr.bf16.mxu0 0
  %357 = vmatpush1.bf16.msra.mxu0 0
  %358 = vmatprep.subr.bf16.mxu0 0
  %359 = vmatpush1.bf16.msra.mxu0 0
  %360 = vmatprep.subr.bf16.mxu0 0
  %361 = vmatpush1.bf16.msra.mxu0 0
  %362 = vmatprep.subr.bf16.mxu0 0
  %363 = vmatpush1.bf16.msra.mxu0 0
  %364 = vmatprep.subr.bf16.mxu0 0
  %365 = vmatpush1.bf16.msra.mxu0 0
  %366 = vmatprep.subr.bf16.mxu0 0
  %367 = vmatpush1.bf16.msra.mxu0 0
  %368 = vmatprep.subr.bf16.mxu0 0
  %369 = vmatpush1.bf16.msra.mxu0 0
  %370 = vmatprep.subr.bf16.mxu0 0
  %371 = vmatpush1.bf16.msra.mxu0 0
  %372 = vmatprep.subr.bf16.mxu0 0
  %373 = vmatpush1.bf16.msra.mxu0 0
  %374 = vmatprep.subr.bf16.mxu0 0
  %375 = vmatpush1.bf16.msra.mxu0 0
  %376 = vmatprep.subr.bf16.mxu0 0
  %377 = vmatpush1.bf16.msra.mxu0 0
  %378 = vmatprep.subr.bf16.mxu0 0
  %379 = vmatpush1.bf16.msra.mxu0 0
  %380 = vmatprep.mubr.bf16.mxu0 0
  %381 = vmatmul.mubr.bf16.gmra.mrb[0].mxu0 %v346
  %v382 = vpop.f32.mrb[0].mxu0
  %v383 = vadd.f32 0.0, %v382
  %v384 = vpop.f32.mrb[0].mxu0
  %v385 = vpop.f32.mrb[0].mxu0
  %v386 = vadd.f32 0.0, %v385
  %v387 = vpop.f32.mrb[0].mxu0
  %388 = vdwg.mxu0
  %389 = vrot.lane.b32.xlu0 %v186, 64
  %v390 = vpop.permute.xlu0 %389
  %v393 = vsel %vm190, %v341, 0
  %395 = vmatprep.subr.bf16.mxu0 0
  %396 = vmatpush1.bf16.msra.mxu0 %v390
  %397 = vmatprep.subr.bf16.mxu0 0
  %398 = vmatpush1.bf16.msra.mxu0 0
  %399 = vmatprep.subr.bf16.mxu0 0
  %400 = vmatpush1.bf16.msra.mxu0 0
  %401 = vmatprep.subr.bf16.mxu0 0
  %402 = vmatpush1.bf16.msra.mxu0 0
  %403 = vmatprep.subr.bf16.mxu0 0
  %404 = vmatpush1.bf16.msra.mxu0 0
  %405 = vmatprep.subr.bf16.mxu0 0
  %406 = vmatpush1.bf16.msra.mxu0 0
  %407 = vmatprep.subr.bf16.mxu0 0
  %408 = vmatpush1.bf16.msra.mxu0 0
  %409 = vmatprep.subr.bf16.mxu0 0
  %410 = vmatpush1.bf16.msra.mxu0 0
  %411 = vmatprep.subr.bf16.mxu0 0
  %412 = vmatpush1.bf16.msra.mxu0 0
  %413 = vmatprep.subr.bf16.mxu0 0
  %414 = vmatpush1.bf16.msra.mxu0 0
  %415 = vmatprep.subr.bf16.mxu0 0
  %416 = vmatpush1.bf16.msra.mxu0 0
  %417 = vmatprep.subr.bf16.mxu0 0
  %418 = vmatpush1.bf16.msra.mxu0 0
  %419 = vmatprep.subr.bf16.mxu0 0
  %420 = vmatpush1.bf16.msra.mxu0 0
  %421 = vmatprep.subr.bf16.mxu0 0
  %422 = vmatpush1.bf16.msra.mxu0 0
  %423 = vmatprep.subr.bf16.mxu0 0
  %424 = vmatpush1.bf16.msra.mxu0 0
  %425 = vmatprep.subr.bf16.mxu0 0
  %426 = vmatpush1.bf16.msra.mxu0 0
  %427 = vmatprep.mubr.bf16.mxu0 0
  %428 = vmatmul.mubr.bf16.gmra.mrb[0].mxu0 %v393
  %v429 = vpop.f32.mrb[0].mxu0
  %v430 = vadd.f32 0.0, %v429
  %v431 = vpop.f32.mrb[0].mxu0
  %v432 = vpop.f32.mrb[0].mxu0
  %v433 = vadd.f32 0.0, %v432
  %v434 = vpop.f32.mrb[0].mxu0
  %435 = vdwg.mxu0
  %436 = vrot.lane.b32.xlu0 %v185, 112
  %v437 = vpop.permute.xlu0 %436
  %438 = vrot.lane.b32.xlu0 %v185, 80
  %v439 = vpop.permute.xlu0 %438
  %v441 = vsel %vm190, %v437, 0
  %v444 = vsel %vm190, %v439, 0
  %446 = vmatprep.subr.bf16.mxu0 0
  %447 = vmatpush1.bf16.xpose.msra.mxu0 %v444
  %448 = vmatprep.subr.bf16.mxu0 0
  %449 = vmatpush1.bf16.xpose.msra.mxu0 0
  %450 = vmatprep.subr.bf16.mxu0 0
  %451 = vmatpush1.bf16.xpose.msra.mxu0 0
  %452 = vmatprep.subr.bf16.mxu0 0
  %453 = vmatpush1.bf16.xpose.msra.mxu0 0
  %454 = vmatprep.subr.bf16.mxu0 0
  %455 = vmatpush1.bf16.xpose.msra.mxu0 0
  %456 = vmatprep.subr.bf16.mxu0 0
  %457 = vmatpush1.bf16.xpose.msra.mxu0 0
  %458 = vmatprep.subr.bf16.mxu0 0
  %459 = vmatpush1.bf16.xpose.msra.mxu0 0
  %460 = vmatprep.subr.bf16.mxu0 0
  %461 = vmatpush1.bf16.xpose.msra.mxu0 0
  %462 = vmatprep.subr.bf16.mxu0 0
  %463 = vmatpush1.bf16.xpose.msra.mxu0 0
  %464 = vmatprep.subr.bf16.mxu0 0
  %465 = vmatpush1.bf16.xpose.msra.mxu0 0
  %466 = vmatprep.subr.bf16.mxu0 0
  %467 = vmatpush1.bf16.xpose.msra.mxu0 0
  %468 = vmatprep.subr.bf16.mxu0 0
  %469 = vmatpush1.bf16.xpose.msra.mxu0 0
  %470 = vmatprep.subr.bf16.mxu0 0
  %471 = vmatpush1.bf16.xpose.msra.mxu0 0
  %472 = vmatprep.subr.bf16.mxu0 0
  %473 = vmatpush1.bf16.xpose.msra.mxu0 0
  %474 = vmatprep.subr.bf16.mxu0 0
  %475 = vmatpush1.bf16.xpose.msra.mxu0 0
  %476 = vmatprep.subr.bf16.mxu0 0
  %477 = vmatpush1.bf16.xpose.msra.mxu0 0
  %478 = vmatprep.mubr.bf16.mxu0 0
  %479 = vmatmul.mubr.bf16.gmra.mrb[0].mxu0 %v441
  %v480 = vpop.f32.mrb[0].mxu0
  %v481 = vadd.f32 0.0, %v480
  %v482 = vpop.f32.mrb[0].mxu0
  %v483 = vpop.f32.mrb[0].mxu0
  %v484 = vadd.f32 0.0, %v483
  %v485 = vpop.f32.mrb[0].mxu0
  %486 = vdwg.mxu0
  %487 = vrot.lane.b32.xlu0 %v186, 112
  %v488 = vpop.permute.xlu0 %487
  %489 = vrot.lane.b32.xlu0 %v186, 80
  %v490 = vpop.permute.xlu0 %489
  %v492 = vsel %vm190, %v488, 0
  %v495 = vsel %vm190, %v490, 0
  %497 = vmatprep.subr.bf16.mxu0 0
  %498 = vmatpush1.bf16.xpose.msra.mxu0 %v495
  %499 = vmatprep.subr.bf16.mxu0 0
  %500 = vmatpush1.bf16.xpose.msra.mxu0 0
  %501 = vmatprep.subr.bf16.mxu0 0
  %502 = vmatpush1.bf16.xpose.msra.mxu0 0
  %503 = vmatprep.subr.bf16.mxu0 0
  %504 = vmatpush1.bf16.xpose.msra.mxu0 0
  %505 = vmatprep.subr.bf16.mxu0 0
  %506 = vmatpush1.bf16.xpose.msra.mxu0 0
  %507 = vmatprep.subr.bf16.mxu0 0
  %508 = vmatpush1.bf16.xpose.msra.mxu0 0
  %509 = vmatprep.subr.bf16.mxu0 0
  %510 = vmatpush1.bf16.xpose.msra.mxu0 0
  %511 = vmatprep.subr.bf16.mxu0 0
  %512 = vmatpush1.bf16.xpose.msra.mxu0 0
  %513 = vmatprep.subr.bf16.mxu0 0
  %514 = vmatpush1.bf16.xpose.msra.mxu0 0
  %515 = vmatprep.subr.bf16.mxu0 0
  %516 = vmatpush1.bf16.xpose.msra.mxu0 0
  %517 = vmatprep.subr.bf16.mxu0 0
  %518 = vmatpush1.bf16.xpose.msra.mxu0 0
  %519 = vmatprep.subr.bf16.mxu0 0
  %520 = vmatpush1.bf16.xpose.msra.mxu0 0
  %521 = vmatprep.subr.bf16.mxu0 0
  %522 = vmatpush1.bf16.xpose.msra.mxu0 0
  %523 = vmatprep.subr.bf16.mxu0 0
  %524 = vmatpush1.bf16.xpose.msra.mxu0 0
  %525 = vmatprep.subr.bf16.mxu0 0
  %526 = vmatpush1.bf16.xpose.msra.mxu0 0
  %527 = vmatprep.subr.bf16.mxu0 0
  %528 = vmatpush1.bf16.xpose.msra.mxu0 0
  %529 = vmatprep.mubr.bf16.mxu0 0
  %530 = vmatmul.mubr.bf16.gmra.mrb[0].mxu0 %v492
  %v531 = vpop.f32.mrb[0].mxu0
  %v532 = vadd.f32 0.0, %v531
  %v533 = vpop.f32.mrb[0].mxu0
  %v534 = vpop.f32.mrb[0].mxu0
  %v535 = vadd.f32 0.0, %v534
  %v536 = vpop.f32.mrb[0].mxu0
  %537 = vdwg.mxu0
  %v538 = vmul.f32 %v481, 0.25
  %v539 = vmul.f32 %v484, 0.25
  %v540 = vmul.f32 %v532, 0.25
  %v541 = vmul.f32 %v535, 0.25
  %v542 = vadd.f32 %v538, %v18
  %v543 = vadd.f32 %v539, %v19
  %v544 = vadd.f32 %v540, %v18
  %v545 = vadd.f32 %v541, %v19
  %v546 = vsel %vm190, %v542, -inf
  %547 = vmax.xlane.f32.xlu0 %v546
  %v548 = vpop.xlane.xlu0 %547
  %v549 = vsel %vm190, %v543, -inf
  %550 = vmax.xlane.f32.xlu0 %v549
  %v551 = vpop.xlane.xlu0 %550
  %v552 = vsel %vm190, %v544, -inf
  %553 = vmax.xlane.f32.xlu0 %v552
  %v554 = vpop.xlane.xlu0 %553
  %v555 = vsel %vm190, %v545, -inf
  %556 = vmax.xlane.f32.xlu0 %v555
  %v557 = vpop.xlane.xlu0 %556
  %v558 = vsub.f32 %v542, %v548
  %v559 = vsub.f32 %v543, %v551
  %v560 = vsub.f32 %v544, %v554
  %v561 = vsub.f32 %v545, %v557
  %v562 = vmul.f32 %v558, 1.442695
  %v563 = vpow.pop %v562
  %v564 = vmul.f32 %v559, 1.442695
  %v565 = vpow.pop %v564
  %v566 = vmul.f32 %v560, 1.442695
  %v567 = vpow.pop %v566
  %v568 = vmul.f32 %v561, 1.442695
  %v569 = vpow.pop %v568
  %v570 = vsel %vm190, %v563, 0.0
  %571 = vadd.xlane.f32.xlu0 %v570
  %v572 = vpop.xlane.xlu0 %571
  %v573 = vsel %vm190, %v565, 0.0
  %574 = vadd.xlane.f32.xlu0 %v573
  %v575 = vpop.xlane.xlu0 %574
  %v576 = vsel %vm190, %v567, 0.0
  %577 = vadd.xlane.f32.xlu0 %v576
  %v578 = vpop.xlane.xlu0 %577
  %v579 = vsel %vm190, %v569, 0.0
  %580 = vadd.xlane.f32.xlu0 %v579
  %v581 = vpop.xlane.xlu0 %580
  %v582 = vrcp.pop %v572
  %v583 = vrcp.pop %v575
  %v584 = vrcp.pop %v578
  %v585 = vrcp.pop %v581
  %v586 = vmul.f32 %v563, %v582
  %v587 = vmul.f32 %v565, %v583
  %v588 = vmul.f32 %v567, %v584
  %v589 = vmul.f32 %v569, %v585
  %v590 = vpack.c.bf16 %v587, %v586
  %v591 = vpack.c.bf16 %v589, %v588
  %592 = vrot.lane.b32.xlu0 %v185, 48
  %v593 = vpop.permute.xlu0 %592
  %v596 = vsel %vm190, %v590, 0
  %598 = vmatprep.subr.bf16.mxu0 0
  %599 = vmatpush1.bf16.msra.mxu0 %v593
  %600 = vmatprep.subr.bf16.mxu0 0
  %601 = vmatpush1.bf16.msra.mxu0 0
  %602 = vmatprep.subr.bf16.mxu0 0
  %603 = vmatpush1.bf16.msra.mxu0 0
  %604 = vmatprep.subr.bf16.mxu0 0
  %605 = vmatpush1.bf16.msra.mxu0 0
  %606 = vmatprep.subr.bf16.mxu0 0
  %607 = vmatpush1.bf16.msra.mxu0 0
  %608 = vmatprep.subr.bf16.mxu0 0
  %609 = vmatpush1.bf16.msra.mxu0 0
  %610 = vmatprep.subr.bf16.mxu0 0
  %611 = vmatpush1.bf16.msra.mxu0 0
  %612 = vmatprep.subr.bf16.mxu0 0
  %613 = vmatpush1.bf16.msra.mxu0 0
  %614 = vmatprep.subr.bf16.mxu0 0
  %615 = vmatpush1.bf16.msra.mxu0 0
  %616 = vmatprep.subr.bf16.mxu0 0
  %617 = vmatpush1.bf16.msra.mxu0 0
  %618 = vmatprep.subr.bf16.mxu0 0
  %619 = vmatpush1.bf16.msra.mxu0 0
  %620 = vmatprep.subr.bf16.mxu0 0
  %621 = vmatpush1.bf16.msra.mxu0 0
  %622 = vmatprep.subr.bf16.mxu0 0
  %623 = vmatpush1.bf16.msra.mxu0 0
  %624 = vmatprep.subr.bf16.mxu0 0
  %625 = vmatpush1.bf16.msra.mxu0 0
  %626 = vmatprep.subr.bf16.mxu0 0
  %627 = vmatpush1.bf16.msra.mxu0 0
  %628 = vmatprep.subr.bf16.mxu0 0
  %629 = vmatpush1.bf16.msra.mxu0 0
  %630 = vmatprep.mubr.bf16.mxu0 0
  %631 = vmatmul.mubr.bf16.gmra.mrb[0].mxu0 %v596
  %v632 = vpop.f32.mrb[0].mxu0
  %v633 = vadd.f32 0.0, %v632
  %v634 = vpop.f32.mrb[0].mxu0
  %v635 = vpop.f32.mrb[0].mxu0
  %v636 = vadd.f32 0.0, %v635
  %v637 = vpop.f32.mrb[0].mxu0
  %638 = vdwg.mxu0
  %639 = vrot.lane.b32.xlu0 %v186, 48
  %v640 = vpop.permute.xlu0 %639
  %v643 = vsel %vm190, %v591, 0
  %645 = vmatprep.subr.bf16.mxu0 0
  %646 = vmatpush1.bf16.msra.mxu0 %v640
  %647 = vmatprep.subr.bf16.mxu0 0
  %648 = vmatpush1.bf16.msra.mxu0 0
  %649 = vmatprep.subr.bf16.mxu0 0
  %650 = vmatpush1.bf16.msra.mxu0 0
  %651 = vmatprep.subr.bf16.mxu0 0
  %652 = vmatpush1.bf16.msra.mxu0 0
  %653 = vmatprep.subr.bf16.mxu0 0
  %654 = vmatpush1.bf16.msra.mxu0 0
  %655 = vmatprep.subr.bf16.mxu0 0
  %656 = vmatpush1.bf16.msra.mxu0 0
  %657 = vmatprep.subr.bf16.mxu0 0
  %658 = vmatpush1.bf16.msra.mxu0 0
  %659 = vmatprep.subr.bf16.mxu0 0
  %660 = vmatpush1.bf16.msra.mxu0 0
  %661 = vmatprep.subr.bf16.mxu0 0
  %662 = vmatpush1.bf16.msra.mxu0 0
  %663 = vmatprep.subr.bf16.mxu0 0
  %664 = vmatpush1.bf16.msra.mxu0 0
  %665 = vmatprep.subr.bf16.mxu0 0
  %666 = vmatpush1.bf16.msra.mxu0 0
  %667 = vmatprep.subr.bf16.mxu0 0
  %668 = vmatpush1.bf16.msra.mxu0 0
  %669 = vmatprep.subr.bf16.mxu0 0
  %670 = vmatpush1.bf16.msra.mxu0 0
  %671 = vmatprep.subr.bf16.mxu0 0
  %672 = vmatpush1.bf16.msra.mxu0 0
  %673 = vmatprep.subr.bf16.mxu0 0
  %674 = vmatpush1.bf16.msra.mxu0 0
  %675 = vmatprep.subr.bf16.mxu0 0
  %676 = vmatpush1.bf16.msra.mxu0 0
  %677 = vmatprep.mubr.bf16.mxu0 0
  %678 = vmatmul.mubr.bf16.gmra.mrb[0].mxu0 %v643
  %v679 = vpop.f32.mrb[0].mxu0
  %v680 = vadd.f32 0.0, %v679
  %v681 = vpop.f32.mrb[0].mxu0
  %v682 = vpop.f32.mrb[0].mxu0
  %v683 = vadd.f32 0.0, %v682
  %v684 = vpop.f32.mrb[0].mxu0
  %685 = vdwg.mxu0
  %690 = vrot.lane.b32.xlu0 %v633, 16
  %v691 = vpop.permute.xlu0 %690
  %692 = vrot.lane.b32.xlu0 %v636, 16
  %v693 = vpop.permute.xlu0 %692
  %694 = vrot.lane.b32.xlu0 %v680, 16
  %v695 = vpop.permute.xlu0 %694
  %696 = vrot.lane.b32.xlu0 %v683, 16
  %v697 = vpop.permute.xlu0 %696
  %v702 = vsel %vm190, %v383, %v691
  %v703 = vsel %vm190, %v386, %v693
  %v704 = vsel %vm190, %v430, %v695
  %v705 = vsel %vm190, %v433, %v697
  %v706 = vpack.c.bf16 %v703, %v702
  %v707 = vpack.c.bf16 %v705, %v704
  %v708 = vld [vmem:[%s2 + $0x28] sm:$0xf]
  %v709 = vld [vmem:[%s2 + $0x2c] sm:$0xf]
  %v710 = vld [vmem:[%s2 + $0x30] sm:$0xf]
  %v711 = vld [vmem:[%s2 + $0x34] sm:$0xf]
  %v712 = vld [vmem:[%s3 + $0x1] sm:$0x1]
  %v713 = vlaneseq
  %v714 = vshrl.u32 %v713, 7
  %v715 = vsub.s32 0, %v714
  %v716 = vrot.slane %v712, %v715
  %v721 = vunpack.c.l.b16 %v708
  %v722 = vunpack.c.l.b16 %v709
  %v723 = vunpack.c.l.b16 %v710
  %v724 = vunpack.c.l.b16 %v711
  %v725 = vpack.c.b16 %v722, %v721
  %v726 = vpack.c.b16 %v724, %v723
  %v730 = vsel %vm129, %v706, 0
  %v733 = vsel %vm129, %v707, 0
  %735 = vmatprep.subr.bf16.mxu0 0
  %736 = vmatpush1.bf16.msra.mxu0 %v725
  %737 = vmatprep.subr.bf16.mxu0 0
  %738 = vmatpush1.bf16.msra.mxu0 %v726
  %739 = vmatprep.subr.bf16.mxu0 0
  %740 = vmatpush1.bf16.msra.mxu0 0
  %741 = vmatprep.subr.bf16.mxu0 0
  %742 = vmatpush1.bf16.msra.mxu0 0
  %743 = vmatprep.subr.bf16.mxu0 0
  %744 = vmatpush1.bf16.msra.mxu0 0
  %745 = vmatprep.subr.bf16.mxu0 0
  %746 = vmatpush1.bf16.msra.mxu0 0
  %747 = vmatprep.subr.bf16.mxu0 0
  %748 = vmatpush1.bf16.msra.mxu0 0
  %749 = vmatprep.subr.bf16.mxu0 0
  %750 = vmatpush1.bf16.msra.mxu0 0
  %751 = vmatprep.subr.bf16.mxu0 0
  %752 = vmatpush1.bf16.msra.mxu0 0
  %753 = vmatprep.subr.bf16.mxu0 0
  %754 = vmatpush1.bf16.msra.mxu0 0
  %755 = vmatprep.subr.bf16.mxu0 0
  %756 = vmatpush1.bf16.msra.mxu0 0
  %757 = vmatprep.subr.bf16.mxu0 0
  %758 = vmatpush1.bf16.msra.mxu0 0
  %759 = vmatprep.subr.bf16.mxu0 0
  %760 = vmatpush1.bf16.msra.mxu0 0
  %761 = vmatprep.subr.bf16.mxu0 0
  %762 = vmatpush1.bf16.msra.mxu0 0
  %763 = vmatprep.subr.bf16.mxu0 0
  %764 = vmatpush1.bf16.msra.mxu0 0
  %765 = vmatprep.subr.bf16.mxu0 0
  %766 = vmatpush1.bf16.msra.mxu0 0
  %767 = vmatprep.mubr.bf16.mxu0 0
  %768 = vmatmul.mubr.bf16.gmra.mrb[0].mxu0 %v730
  %v769 = vpop.f32.mrb[0].mxu0
  %v770 = vadd.f32 %v716, %v769
  %v771 = vpop.f32.mrb[0].mxu0
  %v772 = vpop.f32.mrb[0].mxu0
  %v773 = vadd.f32 %v716, %v772
  %v774 = vpop.f32.mrb[0].mxu0
  %775 = vmatprep.mubr.bf16.mxu0 0
  %776 = vmatmul.mubr.bf16.gmra.mrb[0].mxu0 %v733
  %v777 = vpop.f32.mrb[0].mxu0
  %v778 = vadd.f32 %v716, %v777
  %v779 = vpop.f32.mrb[0].mxu0
  %v780 = vpop.f32.mrb[0].mxu0
  %v781 = vadd.f32 %v716, %v780
  %v782 = vpop.f32.mrb[0].mxu0
  %783 = vdwg.mxu0
  %v784 = vadd.f32 %v92, %v770
  %v785 = vadd.f32 %v95, %v773
  %v786 = vadd.f32 %v100, %v778
  %v787 = vadd.f32 %v103, %v781
  %v788 = vsel %vm129, %v784, 0.0
  %789 = vadd.xlane.f32.xlu0 %v788
  %v790 = vpop.xlane.xlu0 %789
  %v791 = vsel %vm129, %v785, 0.0
  %792 = vadd.xlane.f32.xlu0 %v791
  %v793 = vpop.xlane.xlu0 %792
  %v794 = vsel %vm129, %v786, 0.0
  %795 = vadd.xlane.f32.xlu0 %v794
  %v796 = vpop.xlane.xlu0 %795
  %v797 = vsel %vm129, %v787, 0.0
  %798 = vadd.xlane.f32.xlu0 %v797
  %v799 = vpop.xlane.xlu0 %798
  %v800 = vrcp.pop 32.0
  %v801 = vmul.f32 %v790, %v800
  %v802 = vmul.f32 %v793, %v800
  %v803 = vmul.f32 %v796, %v800
  %v804 = vmul.f32 %v799, %v800
  %v805 = vsub.f32 %v784, %v801
  %v806 = vsub.f32 %v785, %v802
  %v807 = vsub.f32 %v786, %v803
  %v808 = vsub.f32 %v787, %v804
  %v809 = vmul.f32 %v805, %v805
  %v810 = vmul.f32 %v806, %v806
  %v811 = vmul.f32 %v807, %v807
  %v812 = vmul.f32 %v808, %v808
  %v813 = vsel %vm129, %v809, 0.0
  %814 = vadd.xlane.f32.xlu0 %v813
  %v815 = vpop.xlane.xlu0 %814
  %v816 = vsel %vm129, %v810, 0.0
  %817 = vadd.xlane.f32.xlu0 %v816
  %v818 = vpop.xlane.xlu0 %817
  %v819 = vsel %vm129, %v811, 0.0
  %820 = vadd.xlane.f32.xlu0 %v819
  %v821 = vpop.xlane.xlu0 %820
  %v822 = vsel %vm129, %v812, 0.0
  %823 = vadd.xlane.f32.xlu0 %v822
  %v824 = vpop.xlane.xlu0 %823
  %v825 = vmul.f32 %v815, %v800
  %v826 = vmul.f32 %v818, %v800
  %v827 = vmul.f32 %v821, %v800
  %v828 = vmul.f32 %v824, %v800
  %v829 = vadd.f32 %v825, 1e-05
  %v830 = vadd.f32 %v826, 1e-05
  %v831 = vadd.f32 %v827, 1e-05
  %v832 = vadd.f32 %v828, 1e-05
  %v833 = vrsqrt.pop %v829
  %v834 = vrsqrt.pop %v830
  %v835 = vrsqrt.pop %v831
  %v836 = vrsqrt.pop %v832
  %v837 = vmul.f32 %v805, %v833
  %v838 = vmul.f32 %v806, %v834
  %v839 = vmul.f32 %v807, %v835
  %v840 = vmul.f32 %v808, %v836
  %v841 = vld [vmem:[%s3 + $0x2] sm:$0x1]
  %v842 = vlaneseq
  %v843 = vshrl.u32 %v842, 7
  %v844 = vsub.s32 0, %v843
  %v845 = vrot.slane %v841, %v844
  %v846 = vmul.f32 %v837, %v845
  %v847 = vmul.f32 %v838, %v845
  %v848 = vmul.f32 %v839, %v845
  %v849 = vmul.f32 %v840, %v845
  %v850 = vld [vmem:[%s3 + $0x3] sm:$0x1]
  %v851 = vlaneseq
  %v852 = vshrl.u32 %v851, 7
  %v853 = vsub.s32 0, %v852
  %v854 = vrot.slane %v850, %v853
  %v855 = vadd.f32 %v846, %v854
  %v856 = vadd.f32 %v847, %v854
  %v857 = vadd.f32 %v848, %v854
  %v858 = vadd.f32 %v849, %v854
  %v859 = vpack.c.bf16 %v856, %v855
  %v860 = vpack.c.bf16 %v858, %v857
  %v861 = vld [vmem:[%s2 + $0x38] sm:$0xf]
  %v862 = vld [vmem:[%s2 + $0x3c] sm:$0xf]
  %v863 = vld [vmem:[%s2 + $0x40] sm:$0xf]
  %v864 = vld [vmem:[%s2 + $0x44] sm:$0xf]
  %v865 = vld [vmem:[%s3 + $0x4] sm:$0x1]
  %v866 = vlaneseq
  %v867 = vshrl.u32 %v866, 7
  %v868 = vsub.s32 0, %v867
  %v869 = vrot.slane %v865, %v868
  %v874 = vunpack.c.l.b16 %v861
  %v875 = vunpack.c.l.b16 %v862
  %v876 = vunpack.c.l.b16 %v863
  %v877 = vunpack.c.l.b16 %v864
  %v878 = vpack.c.b16 %v875, %v874
  %v879 = vpack.c.b16 %v877, %v876
  %v883 = vsel %vm129, %v859, 0
  %v886 = vsel %vm129, %v860, 0
  %888 = vmatprep.subr.bf16.mxu0 0
  %889 = vmatpush1.bf16.msra.mxu0 %v878
  %890 = vmatprep.subr.bf16.mxu0 0
  %891 = vmatpush1.bf16.msra.mxu0 %v879
  %892 = vmatprep.subr.bf16.mxu0 0
  %893 = vmatpush1.bf16.msra.mxu0 0
  %894 = vmatprep.subr.bf16.mxu0 0
  %895 = vmatpush1.bf16.msra.mxu0 0
  %896 = vmatprep.subr.bf16.mxu0 0
  %897 = vmatpush1.bf16.msra.mxu0 0
  %898 = vmatprep.subr.bf16.mxu0 0
  %899 = vmatpush1.bf16.msra.mxu0 0
  %900 = vmatprep.subr.bf16.mxu0 0
  %901 = vmatpush1.bf16.msra.mxu0 0
  %902 = vmatprep.subr.bf16.mxu0 0
  %903 = vmatpush1.bf16.msra.mxu0 0
  %904 = vmatprep.subr.bf16.mxu0 0
  %905 = vmatpush1.bf16.msra.mxu0 0
  %906 = vmatprep.subr.bf16.mxu0 0
  %907 = vmatpush1.bf16.msra.mxu0 0
  %908 = vmatprep.subr.bf16.mxu0 0
  %909 = vmatpush1.bf16.msra.mxu0 0
  %910 = vmatprep.subr.bf16.mxu0 0
  %911 = vmatpush1.bf16.msra.mxu0 0
  %912 = vmatprep.subr.bf16.mxu0 0
  %913 = vmatpush1.bf16.msra.mxu0 0
  %914 = vmatprep.subr.bf16.mxu0 0
  %915 = vmatpush1.bf16.msra.mxu0 0
  %916 = vmatprep.subr.bf16.mxu0 0
  %917 = vmatpush1.bf16.msra.mxu0 0
  %918 = vmatprep.subr.bf16.mxu0 0
  %919 = vmatpush1.bf16.msra.mxu0 0
  %920 = vmatprep.mubr.bf16.mxu0 0
  %921 = vmatmul.mubr.bf16.gmra.mrb[0].mxu0 %v883
  %v922 = vpop.f32.mrb[0].mxu0
  %v923 = vadd.f32 %v869, %v922
  %v924 = vpop.f32.mrb[0].mxu0
  %v925 = vpop.f32.mrb[0].mxu0
  %v926 = vadd.f32 %v869, %v925
  %v927 = vpop.f32.mrb[0].mxu0
  %928 = vmatprep.mubr.bf16.mxu0 0
  %929 = vmatmul.mubr.bf16.gmra.mrb[0].mxu0 %v886
  %v930 = vpop.f32.mrb[0].mxu0
  %v931 = vadd.f32 %v869, %v930
  %v932 = vpop.f32.mrb[0].mxu0
  %v933 = vpop.f32.mrb[0].mxu0
  %v934 = vadd.f32 %v869, %v933
  %v935 = vpop.f32.mrb[0].mxu0
  %936 = vdwg.mxu0
  %v937 = vmax.f32 %v923, 0.0
  %v938 = vmax.f32 %v926, 0.0
  %v939 = vmax.f32 %v931, 0.0
  %v940 = vmax.f32 %v934, 0.0
  %v941 = vpack.c.bf16 %v938, %v937
  %v942 = vpack.c.bf16 %v940, %v939
  %v943 = vld [vmem:[%s2 + $0x48] sm:$0xf]
  %v944 = vld [vmem:[%s2 + $0x4c] sm:$0xf]
  %v945 = vld [vmem:[%s2 + $0x50] sm:$0xf]
  %v946 = vld [vmem:[%s2 + $0x54] sm:$0xf]
  %v947 = vld [vmem:[%s2 + $0x58] sm:$0xf]
  %v948 = vld [vmem:[%s2 + $0x5c] sm:$0xf]
  %v949 = vld [vmem:[%s2 + $0x60] sm:$0xf]
  %v950 = vld [vmem:[%s2 + $0x64] sm:$0xf]
  %v951 = vld [vmem:[%s3 + $0x5] sm:$0x1]
  %v952 = vlaneseq
  %v953 = vshrl.u32 %v952, 7
  %v954 = vsub.s32 0, %v953
  %v955 = vrot.slane %v951, %v954
  %v964 = vunpack.c.l.b16 %v943
  %v965 = vunpack.c.l.b16 %v944
  %v966 = vunpack.c.l.b16 %v945
  %v967 = vunpack.c.l.b16 %v946
  %v968 = vunpack.c.l.b16 %v947
  %v969 = vunpack.c.l.b16 %v948
  %v970 = vunpack.c.l.b16 %v949
  %v971 = vunpack.c.l.b16 %v950
  %v972 = vpack.c.b16 %v965, %v964
  %v973 = vpack.c.b16 %v967, %v966
  %v974 = vpack.c.b16 %v969, %v968
  %v975 = vpack.c.b16 %v971, %v970
  %vm980 = vcmask 523264
  %v982 = vsel %vm980, %v941, 0
  %v985 = vsel %vm980, %v942, 0
  %987 = vmatprep.subr.bf16.mxu0 0
  %988 = vmatpush1.bf16.msra.mxu0 %v972
  %989 = vmatprep.subr.bf16.mxu0 0
  %990 = vmatpush1.bf16.msra.mxu0 %v973
  %991 = vmatprep.subr.bf16.mxu0 0
  %992 = vmatpush1.bf16.msra.mxu0 %v974
  %993 = vmatprep.subr.bf16.mxu0 0
  %994 = vmatpush1.bf16.msra.mxu0 %v975
  %995 = vmatprep.subr.bf16.mxu0 0
  %996 = vmatpush1.bf16.msra.mxu0 0
  %997 = vmatprep.subr.bf16.mxu0 0
  %998 = vmatpush1.bf16.msra.mxu0 0
  %999 = vmatprep.subr.bf16.mxu0 0
  %1000 = vmatpush1.bf16.msra.mxu0 0
  %1001 = vmatprep.subr.bf16.mxu0 0
  %1002 = vmatpush1.bf16.msra.mxu0 0
  %1003 = vmatprep.subr.bf16.mxu0 0
  %1004 = vmatpush1.bf16.msra.mxu0 0
  %1005 = vmatprep.subr.bf16.mxu0 0
  %1006 = vmatpush1.bf16.msra.mxu0 0
  %1007 = vmatprep.subr.bf16.mxu0 0
  %1008 = vmatpush1.bf16.msra.mxu0 0
  %1009 = vmatprep.subr.bf16.mxu0 0
  %1010 = vmatpush1.bf16.msra.mxu0 0
  %1011 = vmatprep.subr.bf16.mxu0 0
  %1012 = vmatpush1.bf16.msra.mxu0 0
  %1013 = vmatprep.subr.bf16.mxu0 0
  %1014 = vmatpush1.bf16.msra.mxu0 0
  %1015 = vmatprep.subr.bf16.mxu0 0
  %1016 = vmatpush1.bf16.msra.mxu0 0
  %1017 = vmatprep.subr.bf16.mxu0 0
  %1018 = vmatpush1.bf16.msra.mxu0 0
  %1019 = vmatprep.mubr.bf16.mxu0 0
  %1020 = vmatmul.mubr.bf16.gmra.mrb[0].mxu0 %v982
  %v1021 = vpop.f32.mrb[0].mxu0
  %v1022 = vadd.f32 %v955, %v1021
  %v1023 = vpop.f32.mrb[0].mxu0
  %v1024 = vpop.f32.mrb[0].mxu0
  %v1025 = vadd.f32 %v955, %v1024
  %v1026 = vpop.f32.mrb[0].mxu0
  %1027 = vmatprep.mubr.bf16.mxu0 0
  %1028 = vmatmul.mubr.bf16.gmra.mrb[0].mxu0 %v985
  %v1029 = vpop.f32.mrb[0].mxu0
  %v1030 = vadd.f32 %v955, %v1029
  %v1031 = vpop.f32.mrb[0].mxu0
  %v1032 = vpop.f32.mrb[0].mxu0
  %v1033 = vadd.f32 %v955, %v1032
  %v1034 = vpop.f32.mrb[0].mxu0
  %1035 = vdwg.mxu0
  %v1036 = vadd.f32 %v855, %v1022
  %v1037 = vadd.f32 %v856, %v1025
  %v1038 = vadd.f32 %v857, %v1030
  %v1039 = vadd.f32 %v858, %v1033
  %v1040 = vsel %vm129, %v1036, 0.0
  %1041 = vadd.xlane.f32.xlu0 %v1040
  %v1042 = vpop.xlane.xlu0 %1041
  %v1043 = vsel %vm129, %v1037, 0.0
  %1044 = vadd.xlane.f32.xlu0 %v1043
  %v1045 = vpop.xlane.xlu0 %1044
  %v1046 = vsel %vm129, %v1038, 0.0
  %1047 = vadd.xlane.f32.xlu0 %v1046
  %v1048 = vpop.xlane.xlu0 %1047
  %v1049 = vsel %vm129, %v1039, 0.0
  %1050 = vadd.xlane.f32.xlu0 %v1049
  %v1051 = vpop.xlane.xlu0 %1050
  %v1052 = vmul.f32 %v1042, %v800
  %v1053 = vmul.f32 %v1045, %v800
  %v1054 = vmul.f32 %v1048, %v800
  %v1055 = vmul.f32 %v1051, %v800
  %v1056 = vsub.f32 %v1036, %v1052
  %v1057 = vsub.f32 %v1037, %v1053
  %v1058 = vsub.f32 %v1038, %v1054
  %v1059 = vsub.f32 %v1039, %v1055
  %v1060 = vmul.f32 %v1056, %v1056
  %v1061 = vmul.f32 %v1057, %v1057
  %v1062 = vmul.f32 %v1058, %v1058
  %v1063 = vmul.f32 %v1059, %v1059
  %v1064 = vsel %vm129, %v1060, 0.0
  %1065 = vadd.xlane.f32.xlu0 %v1064
  %v1066 = vpop.xlane.xlu0 %1065
  %v1067 = vsel %vm129, %v1061, 0.0
  %1068 = vadd.xlane.f32.xlu0 %v1067
  %v1069 = vpop.xlane.xlu0 %1068
  %v1070 = vsel %vm129, %v1062, 0.0
  %1071 = vadd.xlane.f32.xlu0 %v1070
  %v1072 = vpop.xlane.xlu0 %1071
  %v1073 = vsel %vm129, %v1063, 0.0
  %1074 = vadd.xlane.f32.xlu0 %v1073
  %v1075 = vpop.xlane.xlu0 %1074
  %v1076 = vmul.f32 %v1066, %v800
  %v1077 = vmul.f32 %v1069, %v800
  %v1078 = vmul.f32 %v1072, %v800
  %v1079 = vmul.f32 %v1075, %v800
  %v1080 = vadd.f32 %v1076, 1e-05
  %v1081 = vadd.f32 %v1077, 1e-05
  %v1082 = vadd.f32 %v1078, 1e-05
  %v1083 = vadd.f32 %v1079, 1e-05
  %v1084 = vrsqrt.pop %v1080
  %v1085 = vrsqrt.pop %v1081
  %v1086 = vrsqrt.pop %v1082
  %v1087 = vrsqrt.pop %v1083
  %v1088 = vmul.f32 %v1056, %v1084
  %v1089 = vmul.f32 %v1057, %v1085
  %v1090 = vmul.f32 %v1058, %v1086
  %v1091 = vmul.f32 %v1059, %v1087
  %v1092 = vld [vmem:[%s3 + $0x6] sm:$0x1]
  %v1093 = vlaneseq
  %v1094 = vshrl.u32 %v1093, 7
  %v1095 = vsub.s32 0, %v1094
  %v1096 = vrot.slane %v1092, %v1095
  %v1097 = vmul.f32 %v1088, %v1096
  %v1098 = vmul.f32 %v1089, %v1096
  %v1099 = vmul.f32 %v1090, %v1096
  %v1100 = vmul.f32 %v1091, %v1096
  %v1101 = vld [vmem:[%s3 + $0x7] sm:$0x1]
  %v1102 = vlaneseq
  %v1103 = vshrl.u32 %v1102, 7
  %v1104 = vsub.s32 0, %v1103
  %v1105 = vrot.slane %v1101, %v1104
  %v1106 = vadd.f32 %v1097, %v1105
  %v1107 = vadd.f32 %v1098, %v1105
  %v1108 = vadd.f32 %v1099, %v1105
  %v1109 = vadd.f32 %v1100, %v1105
  %v1110 = vpack.c.bf16 %v1107, %v1106
  %v1111 = vpack.c.bf16 %v1109, %v1108
  %v1112 = vld [vmem:[%s2 + $0x68] sm:$0xf]
  %v1113 = vld [vmem:[%s2 + $0x6c] sm:$0xf]
  %v1114 = vld [vmem:[%s2 + $0x70] sm:$0xf]
  %v1115 = vld [vmem:[%s2 + $0x74] sm:$0xf]
  %v1116 = vld [vmem:[%s3 + $0x8] sm:$0x1]
  %v1117 = vlaneseq
  %v1118 = vshrl.u32 %v1117, 7
  %v1119 = vsub.s32 0, %v1118
  %v1120 = vrot.slane %v1116, %v1119
  %v1125 = vunpack.c.l.b16 %v1112
  %v1126 = vunpack.c.l.b16 %v1113
  %v1127 = vunpack.c.l.b16 %v1114
  %v1128 = vunpack.c.l.b16 %v1115
  %v1129 = vpack.c.b16 %v1126, %v1125
  %v1130 = vpack.c.b16 %v1128, %v1127
  %v1134 = vsel %vm129, %v1110, 0
  %v1137 = vsel %vm129, %v1111, 0
  %1139 = vmatprep.subr.bf16.mxu0 0
  %1140 = vmatpush1.bf16.msra.mxu0 %v1129
  %1141 = vmatprep.subr.bf16.mxu0 0
  %1142 = vmatpush1.bf16.msra.mxu0 %v1130
  %1143 = vmatprep.subr.bf16.mxu0 0
  %1144 = vmatpush1.bf16.msra.mxu0 0
  %1145 = vmatprep.subr.bf16.mxu0 0
  %1146 = vmatpush1.bf16.msra.mxu0 0
  %1147 = vmatprep.subr.bf16.mxu0 0
  %1148 = vmatpush1.bf16.msra.mxu0 0
  %1149 = vmatprep.subr.bf16.mxu0 0
  %1150 = vmatpush1.bf16.msra.mxu0 0
  %1151 = vmatprep.subr.bf16.mxu0 0
  %1152 = vmatpush1.bf16.msra.mxu0 0
  %1153 = vmatprep.subr.bf16.mxu0 0
  %1154 = vmatpush1.bf16.msra.mxu0 0
  %1155 = vmatprep.subr.bf16.mxu0 0
  %1156 = vmatpush1.bf16.msra.mxu0 0
  %1157 = vmatprep.subr.bf16.mxu0 0
  %1158 = vmatpush1.bf16.msra.mxu0 0
  %1159 = vmatprep.subr.bf16.mxu0 0
  %1160 = vmatpush1.bf16.msra.mxu0 0
  %1161 = vmatprep.subr.bf16.mxu0 0
  %1162 = vmatpush1.bf16.msra.mxu0 0
  %1163 = vmatprep.subr.bf16.mxu0 0
  %1164 = vmatpush1.bf16.msra.mxu0 0
  %1165 = vmatprep.subr.bf16.mxu0 0
  %1166 = vmatpush1.bf16.msra.mxu0 0
  %1167 = vmatprep.subr.bf16.mxu0 0
  %1168 = vmatpush1.bf16.msra.mxu0 0
  %1169 = vmatprep.subr.bf16.mxu0 0
  %1170 = vmatpush1.bf16.msra.mxu0 0
  %1171 = vmatprep.mubr.bf16.mxu0 0
  %1172 = vmatmul.mubr.bf16.gmra.mrb[0].mxu0 %v1134
  %v1173 = vpop.f32.mrb[0].mxu0
  %v1174 = vadd.f32 %v1120, %v1173
  %v1175 = vpop.f32.mrb[0].mxu0
  %v1176 = vpop.f32.mrb[0].mxu0
  %v1177 = vadd.f32 %v1120, %v1176
  %v1178 = vpop.f32.mrb[0].mxu0
  %1179 = vmatprep.mubr.bf16.mxu0 0
  %1180 = vmatmul.mubr.bf16.gmra.mrb[0].mxu0 %v1137
  %v1181 = vpop.f32.mrb[0].mxu0
  %v1182 = vadd.f32 %v1120, %v1181
  %v1183 = vpop.f32.mrb[0].mxu0
  %v1184 = vpop.f32.mrb[0].mxu0
  %v1185 = vadd.f32 %v1120, %v1184
  %v1186 = vpop.f32.mrb[0].mxu0
  %1187 = vdwg.mxu0
  %v1188 = vpack.c.bf16 %v1177, %v1174
  %v1189 = vpack.c.bf16 %v1185, %v1182
  %1191 = vrot.lane.b32.xlu0 %v1188, 96
  %v1192 = vpop.permute.xlu0 %1191
  %v1194 = vsel %vm190, %v1188, 0
  %v1197 = vsel %vm190, %v1192, 0
  %1199 = vmatprep.subr.bf16.mxu0 0
  %1200 = vmatpush1.bf16.xpose.msra.mxu0 %v1197
  %1201 = vmatprep.subr.bf16.mxu0 0
  %1202 = vmatpush1.bf16.xpose.msra.mxu0 0
  %1203 = vmatprep.subr.bf16.mxu0 0
  %1204 = vmatpush1.bf16.xpose.msra.mxu0 0
  %1205 = vmatprep.subr.bf16.mxu0 0
  %1206 = vmatpush1.bf16.xpose.msra.mxu0 0
  %1207 = vmatprep.subr.bf16.mxu0 0
  %1208 = vmatpush1.bf16.xpose.msra.mxu0 0
  %1209 = vmatprep.subr.bf16.mxu0 0
  %1210 = vmatpush1.bf16.xpose.msra.mxu0 0
  %1211 = vmatprep.subr.bf16.mxu0 0
  %1212 = vmatpush1.bf16.xpose.msra.mxu0 0
  %1213 = vmatprep.subr.bf16.mxu0 0
  %1214 = vmatpush1.bf16.xpose.msra.mxu0 0
  %1215 = vmatprep.subr.bf16.mxu0 0
  %1216 = vmatpush1.bf16.xpose.msra.mxu0 0
  %1217 = vmatprep.subr.bf16.mxu0 0
  %1218 = vmatpush1.bf16.xpose.msra.mxu0 0
  %1219 = vmatprep.subr.bf16.mxu0 0
  %1220 = vmatpush1.bf16.xpose.msra.mxu0 0
  %1221 = vmatprep.subr.bf16.mxu0 0
  %1222 = vmatpush1.bf16.xpose.msra.mxu0 0
  %1223 = vmatprep.subr.bf16.mxu0 0
  %1224 = vmatpush1.bf16.xpose.msra.mxu0 0
  %1225 = vmatprep.subr.bf16.mxu0 0
  %1226 = vmatpush1.bf16.xpose.msra.mxu0 0
  %1227 = vmatprep.subr.bf16.mxu0 0
  %1228 = vmatpush1.bf16.xpose.msra.mxu0 0
  %1229 = vmatprep.subr.bf16.mxu0 0
  %1230 = vmatpush1.bf16.xpose.msra.mxu0 0
  %1231 = vmatprep.mubr.bf16.mxu0 0
  %1232 = vmatmul.mubr.bf16.gmra.mrb[0].mxu0 %v1194
  %v1233 = vpop.f32.mrb[0].mxu0
  %v1234 = vadd.f32 0.0, %v1233
  %v1235 = vpop.f32.mrb[0].mxu0
  %v1236 = vpop.f32.mrb[0].mxu0
  %v1237 = vadd.f32 0.0, %v1236
  %v1238 = vpop.f32.mrb[0].mxu0
  %1239 = vdwg.mxu0
  %1241 = vrot.lane.b32.xlu0 %v1189, 96
  %v1242 = vpop.permute.xlu0 %1241
  %v1244 = vsel %vm190, %v1189, 0
  %v1247 = vsel %vm190, %v1242, 0
  %1249 = vmatprep.subr.bf16.mxu0 0
  %1250 = vmatpush1.bf16.xpose.msra.mxu0 %v1247
  %1251 = vmatprep.subr.bf16.mxu0 0
  %1252 = vmatpush1.bf16.xpose.msra.mxu0 0
  %1253 = vmatprep.subr.bf16.mxu0 0
  %1254 = vmatpush1.bf16.xpose.msra.mxu0 0
  %1255 = vmatprep.subr.bf16.mxu0 0
  %1256 = vmatpush1.bf16.xpose.msra.mxu0 0
  %1257 = vmatprep.subr.bf16.mxu0 0
  %1258 = vmatpush1.bf16.xpose.msra.mxu0 0
  %1259 = vmatprep.subr.bf16.mxu0 0
  %1260 = vmatpush1.bf16.xpose.msra.mxu0 0
  %1261 = vmatprep.subr.bf16.mxu0 0
  %1262 = vmatpush1.bf16.xpose.msra.mxu0 0
  %1263 = vmatprep.subr.bf16.mxu0 0
  %1264 = vmatpush1.bf16.xpose.msra.mxu0 0
  %1265 = vmatprep.subr.bf16.mxu0 0
  %1266 = vmatpush1.bf16.xpose.msra.mxu0 0
  %1267 = vmatprep.subr.bf16.mxu0 0
  %1268 = vmatpush1.bf16.xpose.msra.mxu0 0
  %1269 = vmatprep.subr.bf16.mxu0 0
  %1270 = vmatpush1.bf16.xpose.msra.mxu0 0
  %1271 = vmatprep.subr.bf16.mxu0 0
  %1272 = vmatpush1.bf16.xpose.msra.mxu0 0
  %1273 = vmatprep.subr.bf16.mxu0 0
  %1274 = vmatpush1.bf16.xpose.msra.mxu0 0
  %1275 = vmatprep.subr.bf16.mxu0 0
  %1276 = vmatpush1.bf16.xpose.msra.mxu0 0
  %1277 = vmatprep.subr.bf16.mxu0 0
  %1278 = vmatpush1.bf16.xpose.msra.mxu0 0
  %1279 = vmatprep.subr.bf16.mxu0 0
  %1280 = vmatpush1.bf16.xpose.msra.mxu0 0
  %1281 = vmatprep.mubr.bf16.mxu0 0
  %1282 = vmatmul.mubr.bf16.gmra.mrb[0].mxu0 %v1244
  %v1283 = vpop.f32.mrb[0].mxu0
  %v1284 = vadd.f32 0.0, %v1283
  %v1285 = vpop.f32.mrb[0].mxu0
  %v1286 = vpop.f32.mrb[0].mxu0
  %v1287 = vadd.f32 0.0, %v1286
  %v1288 = vpop.f32.mrb[0].mxu0
  %1289 = vdwg.mxu0
  %v1290 = vmul.f32 %v1234, 0.25
  %v1291 = vmul.f32 %v1237, 0.25
  %v1292 = vmul.f32 %v1284, 0.25
  %v1293 = vmul.f32 %v1287, 0.25
  %v1294 = vadd.f32 %v1290, %v18
  %v1295 = vadd.f32 %v1291, %v19
  %v1296 = vadd.f32 %v1292, %v18
  %v1297 = vadd.f32 %v1293, %v19
  %v1298 = vsel %vm190, %v1294, -inf
  %1299 = vmax.xlane.f32.xlu0 %v1298
  %v1300 = vpop.xlane.xlu0 %1299
  %v1301 = vsel %vm190, %v1295, -inf
  %1302 = vmax.xlane.f32.xlu0 %v1301
  %v1303 = vpop.xlane.xlu0 %1302
  %v1304 = vsel %vm190, %v1296, -inf
  %1305 = vmax.xlane.f32.xlu0 %v1304
  %v1306 = vpop.xlane.xlu0 %1305
  %v1307 = vsel %vm190, %v1297, -inf
  %1308 = vmax.xlane.f32.xlu0 %v1307
  %v1309 = vpop.xlane.xlu0 %1308
  %v1310 = vsub.f32 %v1294, %v1300
  %v1311 = vsub.f32 %v1295, %v1303
  %v1312 = vsub.f32 %v1296, %v1306
  %v1313 = vsub.f32 %v1297, %v1309
  %v1314 = vmul.f32 %v1310, 1.442695
  %v1315 = vpow.pop %v1314
  %v1316 = vmul.f32 %v1311, 1.442695
  %v1317 = vpow.pop %v1316
  %v1318 = vmul.f32 %v1312, 1.442695
  %v1319 = vpow.pop %v1318
  %v1320 = vmul.f32 %v1313, 1.442695
  %v1321 = vpow.pop %v1320
  %v1322 = vsel %vm190, %v1315, 0.0
  %1323 = vadd.xlane.f32.xlu0 %v1322
  %v1324 = vpop.xlane.xlu0 %1323
  %v1325 = vsel %vm190, %v1317, 0.0
  %1326 = vadd.xlane.f32.xlu0 %v1325
  %v1327 = vpop.xlane.xlu0 %1326
  %v1328 = vsel %vm190, %v1319, 0.0
  %1329 = vadd.xlane.f32.xlu0 %v1328
  %v1330 = vpop.xlane.xlu0 %1329
  %v1331 = vsel %vm190, %v1321, 0.0
  %1332 = vadd.xlane.f32.xlu0 %v1331
  %v1333 = vpop.xlane.xlu0 %1332
  %v1334 = vrcp.pop %v1324
  %v1335 = vrcp.pop %v1327
  %v1336 = vrcp.pop %v1330
  %v1337 = vrcp.pop %v1333
  %v1338 = vmul.f32 %v1315, %v1334
  %v1339 = vmul.f32 %v1317, %v1335
  %v1340 = vmul.f32 %v1319, %v1336
  %v1341 = vmul.f32 %v1321, %v1337
  %v1342 = vpack.c.bf16 %v1339, %v1338
  %v1343 = vpack.c.bf16 %v1341, %v1340
  %1344 = vrot.lane.b32.xlu0 %v1188, 64
  %v1345 = vpop.permute.xlu0 %1344
  %v1348 = vsel %vm190, %v1342, 0
  %1350 = vmatprep.subr.bf16.mxu0 0
  %1351 = vmatpush1.bf16.msra.mxu0 %v1345
  %1352 = vmatprep.subr.bf16.mxu0 0
  %1353 = vmatpush1.bf16.msra.mxu0 0
  %1354 = vmatprep.subr.bf16.mxu0 0
  %1355 = vmatpush1.bf16.msra.mxu0 0
  %1356 = vmatprep.subr.bf16.mxu0 0
  %1357 = vmatpush1.bf16.msra.mxu0 0
  %1358 = vmatprep.subr.bf16.mxu0 0
  %1359 = vmatpush1.bf16.msra.mxu0 0
  %1360 = vmatprep.subr.bf16.mxu0 0
  %1361 = vmatpush1.bf16.msra.mxu0 0
  %1362 = vmatprep.subr.bf16.mxu0 0
  %1363 = vmatpush1.bf16.msra.mxu0 0
  %1364 = vmatprep.subr.bf16.mxu0 0
  %1365 = vmatpush1.bf16.msra.mxu0 0
  %1366 = vmatprep.subr.bf16.mxu0 0
  %1367 = vmatpush1.bf16.msra.mxu0 0
  %1368 = vmatprep.subr.bf16.mxu0 0
  %1369 = vmatpush1.bf16.msra.mxu0 0
  %1370 = vmatprep.subr.bf16.mxu0 0
  %1371 = vmatpush1.bf16.msra.mxu0 0
  %1372 = vmatprep.subr.bf16.mxu0 0
  %1373 = vmatpush1.bf16.msra.mxu0 0
  %1374 = vmatprep.subr.bf16.mxu0 0
  %1375 = vmatpush1.bf16.msra.mxu0 0
  %1376 = vmatprep.subr.bf16.mxu0 0
  %1377 = vmatpush1.bf16.msra.mxu0 0
  %1378 = vmatprep.subr.bf16.mxu0 0
  %1379 = vmatpush1.bf16.msra.mxu0 0
  %1380 = vmatprep.subr.bf16.mxu0 0
  %1381 = vmatpush1.bf16.msra.mxu0 0
  %1382 = vmatprep.mubr.bf16.mxu0 0
  %1383 = vmatmul.mubr.bf16.gmra.mrb[0].mxu0 %v1348
  %v1384 = vpop.f32.mrb[0].mxu0
  %v1385 = vadd.f32 0.0, %v1384
  %v1386 = vpop.f32.mrb[0].mxu0
  %v1387 = vpop.f32.mrb[0].mxu0
  %v1388 = vadd.f32 0.0, %v1387
  %v1389 = vpop.f32.mrb[0].mxu0
  %1390 = vdwg.mxu0
  %1391 = vrot.lane.b32.xlu0 %v1189, 64
  %v1392 = vpop.permute.xlu0 %1391
  %v1395 = vsel %vm190, %v1343, 0
  %1397 = vmatprep.subr.bf16.mxu0 0
  %1398 = vmatpush1.bf16.msra.mxu0 %v1392
  %1399 = vmatprep.subr.bf16.mxu0 0
  %1400 = vmatpush1.bf16.msra.mxu0 0
  %1401 = vmatprep.subr.bf16.mxu0 0
  %1402 = vmatpush1.bf16.msra.mxu0 0
  %1403 = vmatprep.subr.bf16.mxu0 0
  %1404 = vmatpush1.bf16.msra.mxu0 0
  %1405 = vmatprep.subr.bf16.mxu0 0
  %1406 = vmatpush1.bf16.msra.mxu0 0
  %1407 = vmatprep.subr.bf16.mxu0 0
  %1408 = vmatpush1.bf16.msra.mxu0 0
  %1409 = vmatprep.subr.bf16.mxu0 0
  %1410 = vmatpush1.bf16.msra.mxu0 0
  %1411 = vmatprep.subr.bf16.mxu0 0
  %1412 = vmatpush1.bf16.msra.mxu0 0
  %1413 = vmatprep.subr.bf16.mxu0 0
  %1414 = vmatpush1.bf16.msra.mxu0 0
  %1415 = vmatprep.subr.bf16.mxu0 0
  %1416 = vmatpush1.bf16.msra.mxu0 0
  %1417 = vmatprep.subr.bf16.mxu0 0
  %1418 = vmatpush1.bf16.msra.mxu0 0
  %1419 = vmatprep.subr.bf16.mxu0 0
  %1420 = vmatpush1.bf16.msra.mxu0 0
  %1421 = vmatprep.subr.bf16.mxu0 0
  %1422 = vmatpush1.bf16.msra.mxu0 0
  %1423 = vmatprep.subr.bf16.mxu0 0
  %1424 = vmatpush1.bf16.msra.mxu0 0
  %1425 = vmatprep.subr.bf16.mxu0 0
  %1426 = vmatpush1.bf16.msra.mxu0 0
  %1427 = vmatprep.subr.bf16.mxu0 0
  %1428 = vmatpush1.bf16.msra.mxu0 0
  %1429 = vmatprep.mubr.bf16.mxu0 0
  %1430 = vmatmul.mubr.bf16.gmra.mrb[0].mxu0 %v1395
  %v1431 = vpop.f32.mrb[0].mxu0
  %v1432 = vadd.f32 0.0, %v1431
  %v1433 = vpop.f32.mrb[0].mxu0
  %v1434 = vpop.f32.mrb[0].mxu0
  %v1435 = vadd.f32 0.0, %v1434
  %v1436 = vpop.f32.mrb[0].mxu0
  %1437 = vdwg.mxu0
  %1438 = vrot.lane.b32.xlu0 %v1188, 112
  %v1439 = vpop.permute.xlu0 %1438
  %1440 = vrot.lane.b32.xlu0 %v1188, 80
  %v1441 = vpop.permute.xlu0 %1440
  %v1443 = vsel %vm190, %v1439, 0
  %v1446 = vsel %vm190, %v1441, 0
  %1448 = vmatprep.subr.bf16.mxu0 0
  %1449 = vmatpush1.bf16.xpose.msra.mxu0 %v1446
  %1450 = vmatprep.subr.bf16.mxu0 0
  %1451 = vmatpush1.bf16.xpose.msra.mxu0 0
  %1452 = vmatprep.subr.bf16.mxu0 0
  %1453 = vmatpush1.bf16.xpose.msra.mxu0 0
  %1454 = vmatprep.subr.bf16.mxu0 0
  %1455 = vmatpush1.bf16.xpose.msra.mxu0 0
  %1456 = vmatprep.subr.bf16.mxu0 0
  %1457 = vmatpush1.bf16.xpose.msra.mxu0 0
  %1458 = vmatprep.subr.bf16.mxu0 0
  %1459 = vmatpush1.bf16.xpose.msra.mxu0 0
  %1460 = vmatprep.subr.bf16.mxu0 0
  %1461 = vmatpush1.bf16.xpose.msra.mxu0 0
  %1462 = vmatprep.subr.bf16.mxu0 0
  %1463 = vmatpush1.bf16.xpose.msra.mxu0 0
  %1464 = vmatprep.subr.bf16.mxu0 0
  %1465 = vmatpush1.bf16.xpose.msra.mxu0 0
  %1466 = vmatprep.subr.bf16.mxu0 0
  %1467 = vmatpush1.bf16.xpose.msra.mxu0 0
  %1468 = vmatprep.subr.bf16.mxu0 0
  %1469 = vmatpush1.bf16.xpose.msra.mxu0 0
  %1470 = vmatprep.subr.bf16.mxu0 0
  %1471 = vmatpush1.bf16.xpose.msra.mxu0 0
  %1472 = vmatprep.subr.bf16.mxu0 0
  %1473 = vmatpush1.bf16.xpose.msra.mxu0 0
  %1474 = vmatprep.subr.bf16.mxu0 0
  %1475 = vmatpush1.bf16.xpose.msra.mxu0 0
  %1476 = vmatprep.subr.bf16.mxu0 0
  %1477 = vmatpush1.bf16.xpose.msra.mxu0 0
  %1478 = vmatprep.subr.bf16.mxu0 0
  %1479 = vmatpush1.bf16.xpose.msra.mxu0 0
  %1480 = vmatprep.mubr.bf16.mxu0 0
  %1481 = vmatmul.mubr.bf16.gmra.mrb[0].mxu0 %v1443
  %v1482 = vpop.f32.mrb[0].mxu0
  %v1483 = vadd.f32 0.0, %v1482
  %v1484 = vpop.f32.mrb[0].mxu0
  %v1485 = vpop.f32.mrb[0].mxu0
  %v1486 = vadd.f32 0.0, %v1485
  %v1487 = vpop.f32.mrb[0].mxu0
  %1488 = vdwg.mxu0
  %1489 = vrot.lane.b32.xlu0 %v1189, 112
  %v1490 = vpop.permute.xlu0 %1489
  %1491 = vrot.lane.b32.xlu0 %v1189, 80
  %v1492 = vpop.permute.xlu0 %1491
  %v1494 = vsel %vm190, %v1490, 0
  %v1497 = vsel %vm190, %v1492, 0
  %1499 = vmatprep.subr.bf16.mxu0 0
  %1500 = vmatpush1.bf16.xpose.msra.mxu0 %v1497
  %1501 = vmatprep.subr.bf16.mxu0 0
  %1502 = vmatpush1.bf16.xpose.msra.mxu0 0
  %1503 = vmatprep.subr.bf16.mxu0 0
  %1504 = vmatpush1.bf16.xpose.msra.mxu0 0
  %1505 = vmatprep.subr.bf16.mxu0 0
  %1506 = vmatpush1.bf16.xpose.msra.mxu0 0
  %1507 = vmatprep.subr.bf16.mxu0 0
  %1508 = vmatpush1.bf16.xpose.msra.mxu0 0
  %1509 = vmatprep.subr.bf16.mxu0 0
  %1510 = vmatpush1.bf16.xpose.msra.mxu0 0
  %1511 = vmatprep.subr.bf16.mxu0 0
  %1512 = vmatpush1.bf16.xpose.msra.mxu0 0
  %1513 = vmatprep.subr.bf16.mxu0 0
  %1514 = vmatpush1.bf16.xpose.msra.mxu0 0
  %1515 = vmatprep.subr.bf16.mxu0 0
  %1516 = vmatpush1.bf16.xpose.msra.mxu0 0
  %1517 = vmatprep.subr.bf16.mxu0 0
  %1518 = vmatpush1.bf16.xpose.msra.mxu0 0
  %1519 = vmatprep.subr.bf16.mxu0 0
  %1520 = vmatpush1.bf16.xpose.msra.mxu0 0
  %1521 = vmatprep.subr.bf16.mxu0 0
  %1522 = vmatpush1.bf16.xpose.msra.mxu0 0
  %1523 = vmatprep.subr.bf16.mxu0 0
  %1524 = vmatpush1.bf16.xpose.msra.mxu0 0
  %1525 = vmatprep.subr.bf16.mxu0 0
  %1526 = vmatpush1.bf16.xpose.msra.mxu0 0
  %1527 = vmatprep.subr.bf16.mxu0 0
  %1528 = vmatpush1.bf16.xpose.msra.mxu0 0
  %1529 = vmatprep.subr.bf16.mxu0 0
  %1530 = vmatpush1.bf16.xpose.msra.mxu0 0
  %1531 = vmatprep.mubr.bf16.mxu0 0
  %1532 = vmatmul.mubr.bf16.gmra.mrb[0].mxu0 %v1494
  %v1533 = vpop.f32.mrb[0].mxu0
  %v1534 = vadd.f32 0.0, %v1533
  %v1535 = vpop.f32.mrb[0].mxu0
  %v1536 = vpop.f32.mrb[0].mxu0
  %v1537 = vadd.f32 0.0, %v1536
  %v1538 = vpop.f32.mrb[0].mxu0
  %1539 = vdwg.mxu0
  %v1540 = vmul.f32 %v1483, 0.25
  %v1541 = vmul.f32 %v1486, 0.25
  %v1542 = vmul.f32 %v1534, 0.25
  %v1543 = vmul.f32 %v1537, 0.25
  %v1544 = vadd.f32 %v1540, %v18
  %v1545 = vadd.f32 %v1541, %v19
  %v1546 = vadd.f32 %v1542, %v18
  %v1547 = vadd.f32 %v1543, %v19
  %v1548 = vsel %vm190, %v1544, -inf
  %1549 = vmax.xlane.f32.xlu0 %v1548
  %v1550 = vpop.xlane.xlu0 %1549
  %v1551 = vsel %vm190, %v1545, -inf
  %1552 = vmax.xlane.f32.xlu0 %v1551
  %v1553 = vpop.xlane.xlu0 %1552
  %v1554 = vsel %vm190, %v1546, -inf
  %1555 = vmax.xlane.f32.xlu0 %v1554
  %v1556 = vpop.xlane.xlu0 %1555
  %v1557 = vsel %vm190, %v1547, -inf
  %1558 = vmax.xlane.f32.xlu0 %v1557
  %v1559 = vpop.xlane.xlu0 %1558
  %v1560 = vsub.f32 %v1544, %v1550
  %v1561 = vsub.f32 %v1545, %v1553
  %v1562 = vsub.f32 %v1546, %v1556
  %v1563 = vsub.f32 %v1547, %v1559
  %v1564 = vmul.f32 %v1560, 1.442695
  %v1565 = vpow.pop %v1564
  %v1566 = vmul.f32 %v1561, 1.442695
  %v1567 = vpow.pop %v1566
  %v1568 = vmul.f32 %v1562, 1.442695
  %v1569 = vpow.pop %v1568
  %v1570 = vmul.f32 %v1563, 1.442695
  %v1571 = vpow.pop %v1570
  %v1572 = vsel %vm190, %v1565, 0.0
  %1573 = vadd.xlane.f32.xlu0 %v1572
  %v1574 = vpop.xlane.xlu0 %1573
  %v1575 = vsel %vm190, %v1567, 0.0
  %1576 = vadd.xlane.f32.xlu0 %v1575
  %v1577 = vpop.xlane.xlu0 %1576
  %v1578 = vsel %vm190, %v1569, 0.0
  %1579 = vadd.xlane.f32.xlu0 %v1578
  %v1580 = vpop.xlane.xlu0 %1579
  %v1581 = vsel %vm190, %v1571, 0.0
  %1582 = vadd.xlane.f32.xlu0 %v1581
  %v1583 = vpop.xlane.xlu0 %1582
  %v1584 = vrcp.pop %v1574
  %v1585 = vrcp.pop %v1577
  %v1586 = vrcp.pop %v1580
  %v1587 = vrcp.pop %v1583
  %v1588 = vmul.f32 %v1565, %v1584
  %v1589 = vmul.f32 %v1567, %v1585
  %v1590 = vmul.f32 %v1569, %v1586
  %v1591 = vmul.f32 %v1571, %v1587
  %v1592 = vpack.c.bf16 %v1589, %v1588
  %v1593 = vpack.c.bf16 %v1591, %v1590
  %1594 = vrot.lane.b32.xlu0 %v1188, 48
  %v1595 = vpop.permute.xlu0 %1594
  %v1598 = vsel %vm190, %v1592, 0
  %1600 = vmatprep.subr.bf16.mxu0 0
  %1601 = vmatpush1.bf16.msra.mxu0 %v1595
  %1602 = vmatprep.subr.bf16.mxu0 0
  %1603 = vmatpush1.bf16.msra.mxu0 0
  %1604 = vmatprep.subr.bf16.mxu0 0
  %1605 = vmatpush1.bf16.msra.mxu0 0
  %1606 = vmatprep.subr.bf16.mxu0 0
  %1607 = vmatpush1.bf16.msra.mxu0 0
  %1608 = vmatprep.subr.bf16.mxu0 0
  %1609 = vmatpush1.bf16.msra.mxu0 0
  %1610 = vmatprep.subr.bf16.mxu0 0
  %1611 = vmatpush1.bf16.msra.mxu0 0
  %1612 = vmatprep.subr.bf16.mxu0 0
  %1613 = vmatpush1.bf16.msra.mxu0 0
  %1614 = vmatprep.subr.bf16.mxu0 0
  %1615 = vmatpush1.bf16.msra.mxu0 0
  %1616 = vmatprep.subr.bf16.mxu0 0
  %1617 = vmatpush1.bf16.msra.mxu0 0
  %1618 = vmatprep.subr.bf16.mxu0 0
  %1619 = vmatpush1.bf16.msra.mxu0 0
  %1620 = vmatprep.subr.bf16.mxu0 0
  %1621 = vmatpush1.bf16.msra.mxu0 0
  %1622 = vmatprep.subr.bf16.mxu0 0
  %1623 = vmatpush1.bf16.msra.mxu0 0
  %1624 = vmatprep.subr.bf16.mxu0 0
  %1625 = vmatpush1.bf16.msra.mxu0 0
  %1626 = vmatprep.subr.bf16.mxu0 0
  %1627 = vmatpush1.bf16.msra.mxu0 0
  %1628 = vmatprep.subr.bf16.mxu0 0
  %1629 = vmatpush1.bf16.msra.mxu0 0
  %1630 = vmatprep.subr.bf16.mxu0 0
  %1631 = vmatpush1.bf16.msra.mxu0 0
  %1632 = vmatprep.mubr.bf16.mxu0 0
  %1633 = vmatmul.mubr.bf16.gmra.mrb[0].mxu0 %v1598
  %v1634 = vpop.f32.mrb[0].mxu0
  %v1635 = vadd.f32 0.0, %v1634
  %v1636 = vpop.f32.mrb[0].mxu0
  %v1637 = vpop.f32.mrb[0].mxu0
  %v1638 = vadd.f32 0.0, %v1637
  %v1639 = vpop.f32.mrb[0].mxu0
  %1640 = vdwg.mxu0
  %1641 = vrot.lane.b32.xlu0 %v1189, 48
  %v1642 = vpop.permute.xlu0 %1641
  %v1645 = vsel %vm190, %v1593, 0
  %1647 = vmatprep.subr.bf16.mxu0 0
  %1648 = vmatpush1.bf16.msra.mxu0 %v1642
  %1649 = vmatprep.subr.bf16.mxu0 0
  %1650 = vmatpush1.bf16.msra.mxu0 0
  %1651 = vmatprep.subr.bf16.mxu0 0
  %1652 = vmatpush1.bf16.msra.mxu0 0
  %1653 = vmatprep.subr.bf16.mxu0 0
  %1654 = vmatpush1.bf16.msra.mxu0 0
  %1655 = vmatprep.subr.bf16.mxu0 0
  %1656 = vmatpush1.bf16.msra.mxu0 0
  %1657 = vmatprep.subr.bf16.mxu0 0
  %1658 = vmatpush1.bf16.msra.mxu0 0
  %1659 = vmatprep.subr.bf16.mxu0 0
  %1660 = vmatpush1.bf16.msra.mxu0 0
  %1661 = vmatprep.subr.bf16.mxu0 0
  %1662 = vmatpush1.bf16.msra.mxu0 0
  %1663 = vmatprep.subr.bf16.mxu0 0
  %1664 = vmatpush1.bf16.msra.mxu0 0
  %1665 = vmatprep.subr.bf16.mxu0 0
  %1666 = vmatpush1.bf16.msra.mxu0 0
  %1667 = vmatprep.subr.bf16.mxu0 0
  %1668 = vmatpush1.bf16.msra.mxu0 0
  %1669 = vmatprep.subr.bf16.mxu0 0
  %1670 = vmatpush1.bf16.msra.mxu0 0
  %1671 = vmatprep.subr.bf16.mxu0 0
  %1672 = vmatpush1.bf16.msra.mxu0 0
  %1673 = vmatprep.subr.bf16.mxu0 0
  %1674 = vmatpush1.bf16.msra.mxu0 0
  %1675 = vmatprep.subr.bf16.mxu0 0
  %1676 = vmatpush1.bf16.msra.mxu0 0
  %1677 = vmatprep.subr.bf16.mxu0 0
  %1678 = vmatpush1.bf16.msra.mxu0 0
  %1679 = vmatprep.mubr.bf16.mxu0 0
  %1680 = vmatmul.mubr.bf16.gmra.mrb[0].mxu0 %v1645
  %v1681 = vpop.f32.mrb[0].mxu0
  %v1682 = vadd.f32 0.0, %v1681
  %v1683 = vpop.f32.mrb[0].mxu0
  %v1684 = vpop.f32.mrb[0].mxu0
  %v1685 = vadd.f32 0.0, %v1684
  %v1686 = vpop.f32.mrb[0].mxu0
  %1687 = vdwg.mxu0
  %1692 = vrot.lane.b32.xlu0 %v1635, 16
  %v1693 = vpop.permute.xlu0 %1692
  %1694 = vrot.lane.b32.xlu0 %v1638, 16
  %v1695 = vpop.permute.xlu0 %1694
  %1696 = vrot.lane.b32.xlu0 %v1682, 16
  %v1697 = vpop.permute.xlu0 %1696
  %1698 = vrot.lane.b32.xlu0 %v1685, 16
  %v1699 = vpop.permute.xlu0 %1698
  %v1704 = vsel %vm190, %v1385, %v1693
  %v1705 = vsel %vm190, %v1388, %v1695
  %v1706 = vsel %vm190, %v1432, %v1697
  %v1707 = vsel %vm190, %v1435, %v1699
  %v1708 = vpack.c.bf16 %v1705, %v1704
  %v1709 = vpack.c.bf16 %v1707, %v1706
  %v1710 = vld [vmem:[%s2 + $0x78] sm:$0xf]
  %v1711 = vld [vmem:[%s2 + $0x7c] sm:$0xf]
  %v1712 = vld [vmem:[%s2 + $0x80] sm:$0xf]
  %v1713 = vld [vmem:[%s2 + $0x84] sm:$0xf]
  %v1714 = vld [vmem:[%s3 + $0x9] sm:$0x1]
  %v1715 = vlaneseq
  %v1716 = vshrl.u32 %v1715, 7
  %v1717 = vsub.s32 0, %v1716
  %v1718 = vrot.slane %v1714, %v1717
  %v1723 = vunpack.c.l.b16 %v1710
  %v1724 = vunpack.c.l.b16 %v1711
  %v1725 = vunpack.c.l.b16 %v1712
  %v1726 = vunpack.c.l.b16 %v1713
  %v1727 = vpack.c.b16 %v1724, %v1723
  %v1728 = vpack.c.b16 %v1726, %v1725
  %v1732 = vsel %vm129, %v1708, 0
  %v1735 = vsel %vm129, %v1709, 0
  %1737 = vmatprep.subr.bf16.mxu0 0
  %1738 = vmatpush1.bf16.msra.mxu0 %v1727
  %1739 = vmatprep.subr.bf16.mxu0 0
  %1740 = vmatpush1.bf16.msra.mxu0 %v1728
  %1741 = vmatprep.subr.bf16.mxu0 0
  %1742 = vmatpush1.bf16.msra.mxu0 0
  %1743 = vmatprep.subr.bf16.mxu0 0
  %1744 = vmatpush1.bf16.msra.mxu0 0
  %1745 = vmatprep.subr.bf16.mxu0 0
  %1746 = vmatpush1.bf16.msra.mxu0 0
  %1747 = vmatprep.subr.bf16.mxu0 0
  %1748 = vmatpush1.bf16.msra.mxu0 0
  %1749 = vmatprep.subr.bf16.mxu0 0
  %1750 = vmatpush1.bf16.msra.mxu0 0
  %1751 = vmatprep.subr.bf16.mxu0 0
  %1752 = vmatpush1.bf16.msra.mxu0 0
  %1753 = vmatprep.subr.bf16.mxu0 0
  %1754 = vmatpush1.bf16.msra.mxu0 0
  %1755 = vmatprep.subr.bf16.mxu0 0
  %1756 = vmatpush1.bf16.msra.mxu0 0
  %1757 = vmatprep.subr.bf16.mxu0 0
  %1758 = vmatpush1.bf16.msra.mxu0 0
  %1759 = vmatprep.subr.bf16.mxu0 0
  %1760 = vmatpush1.bf16.msra.mxu0 0
  %1761 = vmatprep.subr.bf16.mxu0 0
  %1762 = vmatpush1.bf16.msra.mxu0 0
  %1763 = vmatprep.subr.bf16.mxu0 0
  %1764 = vmatpush1.bf16.msra.mxu0 0
  %1765 = vmatprep.subr.bf16.mxu0 0
  %1766 = vmatpush1.bf16.msra.mxu0 0
  %1767 = vmatprep.subr.bf16.mxu0 0
  %1768 = vmatpush1.bf16.msra.mxu0 0
  %1769 = vmatprep.mubr.bf16.mxu0 0
  %1770 = vmatmul.mubr.bf16.gmra.mrb[0].mxu0 %v1732
  %v1771 = vpop.f32.mrb[0].mxu0
  %v1772 = vadd.f32 %v1718, %v1771
  %v1773 = vpop.f32.mrb[0].mxu0
  %v1774 = vpop.f32.mrb[0].mxu0
  %v1775 = vadd.f32 %v1718, %v1774
  %v1776 = vpop.f32.mrb[0].mxu0
  %1777 = vmatprep.mubr.bf16.mxu0 0
  %1778 = vmatmul.mubr.bf16.gmra.mrb[0].mxu0 %v1735
  %v1779 = vpop.f32.mrb[0].mxu0
  %v1780 = vadd.f32 %v1718, %v1779
  %v1781 = vpop.f32.mrb[0].mxu0
  %v1782 = vpop.f32.mrb[0].mxu0
  %v1783 = vadd.f32 %v1718, %v1782
  %v1784 = vpop.f32.mrb[0].mxu0
  %1785 = vdwg.mxu0
  %v1786 = vadd.f32 %v1106, %v1772
  %v1787 = vadd.f32 %v1107, %v1775
  %v1788 = vadd.f32 %v1108, %v1780
  %v1789 = vadd.f32 %v1109, %v1783
  %v1790 = vsel %vm129, %v1786, 0.0
  %1791 = vadd.xlane.f32.xlu0 %v1790
  %v1792 = vpop.xlane.xlu0 %1791
  %v1793 = vsel %vm129, %v1787, 0.0
  %1794 = vadd.xlane.f32.xlu0 %v1793
  %v1795 = vpop.xlane.xlu0 %1794
  %v1796 = vsel %vm129, %v1788, 0.0
  %1797 = vadd.xlane.f32.xlu0 %v1796
  %v1798 = vpop.xlane.xlu0 %1797
  %v1799 = vsel %vm129, %v1789, 0.0
  %1800 = vadd.xlane.f32.xlu0 %v1799
  %v1801 = vpop.xlane.xlu0 %1800
  %v1802 = vmul.f32 %v1792, %v800
  %v1803 = vmul.f32 %v1795, %v800
  %v1804 = vmul.f32 %v1798, %v800
  %v1805 = vmul.f32 %v1801, %v800
  %v1806 = vsub.f32 %v1786, %v1802
  %v1807 = vsub.f32 %v1787, %v1803
  %v1808 = vsub.f32 %v1788, %v1804
  %v1809 = vsub.f32 %v1789, %v1805
  %v1810 = vmul.f32 %v1806, %v1806
  %v1811 = vmul.f32 %v1807, %v1807
  %v1812 = vmul.f32 %v1808, %v1808
  %v1813 = vmul.f32 %v1809, %v1809
  %v1814 = vsel %vm129, %v1810, 0.0
  %1815 = vadd.xlane.f32.xlu0 %v1814
  %v1816 = vpop.xlane.xlu0 %1815
  %v1817 = vsel %vm129, %v1811, 0.0
  %1818 = vadd.xlane.f32.xlu0 %v1817
  %v1819 = vpop.xlane.xlu0 %1818
  %v1820 = vsel %vm129, %v1812, 0.0
  %1821 = vadd.xlane.f32.xlu0 %v1820
  %v1822 = vpop.xlane.xlu0 %1821
  %v1823 = vsel %vm129, %v1813, 0.0
  %1824 = vadd.xlane.f32.xlu0 %v1823
  %v1825 = vpop.xlane.xlu0 %1824
  %v1826 = vmul.f32 %v1816, %v800
  %v1827 = vmul.f32 %v1819, %v800
  %v1828 = vmul.f32 %v1822, %v800
  %v1829 = vmul.f32 %v1825, %v800
  %v1830 = vadd.f32 %v1826, 1e-05
  %v1831 = vadd.f32 %v1827, 1e-05
  %v1832 = vadd.f32 %v1828, 1e-05
  %v1833 = vadd.f32 %v1829, 1e-05
  %v1834 = vrsqrt.pop %v1830
  %v1835 = vrsqrt.pop %v1831
  %v1836 = vrsqrt.pop %v1832
  %v1837 = vrsqrt.pop %v1833
  %v1838 = vmul.f32 %v1806, %v1834
  %v1839 = vmul.f32 %v1807, %v1835
  %v1840 = vmul.f32 %v1808, %v1836
  %v1841 = vmul.f32 %v1809, %v1837
  %v1842 = vld [vmem:[%s3 + $0xa] sm:$0x1]
  %v1843 = vlaneseq
  %v1844 = vshrl.u32 %v1843, 7
  %v1845 = vsub.s32 0, %v1844
  %v1846 = vrot.slane %v1842, %v1845
  %v1847 = vmul.f32 %v1838, %v1846
  %v1848 = vmul.f32 %v1839, %v1846
  %v1849 = vmul.f32 %v1840, %v1846
  %v1850 = vmul.f32 %v1841, %v1846
  %v1851 = vld [vmem:[%s3 + $0xb] sm:$0x1]
  %v1852 = vlaneseq
  %v1853 = vshrl.u32 %v1852, 7
  %v1854 = vsub.s32 0, %v1853
  %v1855 = vrot.slane %v1851, %v1854
  %v1856 = vadd.f32 %v1847, %v1855
  %v1857 = vadd.f32 %v1848, %v1855
  %v1858 = vadd.f32 %v1849, %v1855
  %v1859 = vadd.f32 %v1850, %v1855
  %v1860 = vpack.c.bf16 %v1857, %v1856
  %v1861 = vpack.c.bf16 %v1859, %v1858
  %v1862 = vld [vmem:[%s2 + $0x88] sm:$0xf]
  %v1863 = vld [vmem:[%s2 + $0x8c] sm:$0xf]
  %v1864 = vld [vmem:[%s2 + $0x90] sm:$0xf]
  %v1865 = vld [vmem:[%s2 + $0x94] sm:$0xf]
  %v1866 = vld [vmem:[%s3 + $0xc] sm:$0x1]
  %v1867 = vlaneseq
  %v1868 = vshrl.u32 %v1867, 7
  %v1869 = vsub.s32 0, %v1868
  %v1870 = vrot.slane %v1866, %v1869
  %v1875 = vunpack.c.l.b16 %v1862
  %v1876 = vunpack.c.l.b16 %v1863
  %v1877 = vunpack.c.l.b16 %v1864
  %v1878 = vunpack.c.l.b16 %v1865
  %v1879 = vpack.c.b16 %v1876, %v1875
  %v1880 = vpack.c.b16 %v1878, %v1877
  %v1884 = vsel %vm129, %v1860, 0
  %v1887 = vsel %vm129, %v1861, 0
  %1889 = vmatprep.subr.bf16.mxu0 0
  %1890 = vmatpush1.bf16.msra.mxu0 %v1879
  %1891 = vmatprep.subr.bf16.mxu0 0
  %1892 = vmatpush1.bf16.msra.mxu0 %v1880
  %1893 = vmatprep.subr.bf16.mxu0 0
  %1894 = vmatpush1.bf16.msra.mxu0 0
  %1895 = vmatprep.subr.bf16.mxu0 0
  %1896 = vmatpush1.bf16.msra.mxu0 0
  %1897 = vmatprep.subr.bf16.mxu0 0
  %1898 = vmatpush1.bf16.msra.mxu0 0
  %1899 = vmatprep.subr.bf16.mxu0 0
  %1900 = vmatpush1.bf16.msra.mxu0 0
  %1901 = vmatprep.subr.bf16.mxu0 0
  %1902 = vmatpush1.bf16.msra.mxu0 0
  %1903 = vmatprep.subr.bf16.mxu0 0
  %1904 = vmatpush1.bf16.msra.mxu0 0
  %1905 = vmatprep.subr.bf16.mxu0 0
  %1906 = vmatpush1.bf16.msra.mxu0 0
  %1907 = vmatprep.subr.bf16.mxu0 0
  %1908 = vmatpush1.bf16.msra.mxu0 0
  %1909 = vmatprep.subr.bf16.mxu0 0
  %1910 = vmatpush1.bf16.msra.mxu0 0
  %1911 = vmatprep.subr.bf16.mxu0 0
  %1912 = vmatpush1.bf16.msra.mxu0 0
  %1913 = vmatprep.subr.bf16.mxu0 0
  %1914 = vmatpush1.bf16.msra.mxu0 0
  %1915 = vmatprep.subr.bf16.mxu0 0
  %1916 = vmatpush1.bf16.msra.mxu0 0
  %1917 = vmatprep.subr.bf16.mxu0 0
  %1918 = vmatpush1.bf16.msra.mxu0 0
  %1919 = vmatprep.subr.bf16.mxu0 0
  %1920 = vmatpush1.bf16.msra.mxu0 0
  %1921 = vmatprep.mubr.bf16.mxu0 0
  %1922 = vmatmul.mubr.bf16.gmra.mrb[0].mxu0 %v1884
  %v1923 = vpop.f32.mrb[0].mxu0
  %v1924 = vadd.f32 %v1870, %v1923
  %v1925 = vpop.f32.mrb[0].mxu0
  %v1926 = vpop.f32.mrb[0].mxu0
  %v1927 = vadd.f32 %v1870, %v1926
  %v1928 = vpop.f32.mrb[0].mxu0
  %1929 = vmatprep.mubr.bf16.mxu0 0
  %1930 = vmatmul.mubr.bf16.gmra.mrb[0].mxu0 %v1887
  %v1931 = vpop.f32.mrb[0].mxu0
  %v1932 = vadd.f32 %v1870, %v1931
  %v1933 = vpop.f32.mrb[0].mxu0
  %v1934 = vpop.f32.mrb[0].mxu0
  %v1935 = vadd.f32 %v1870, %v1934
  %v1936 = vpop.f32.mrb[0].mxu0
  %1937 = vdwg.mxu0
  %v1938 = vmax.f32 %v1924, 0.0
  %v1939 = vmax.f32 %v1927, 0.0
  %v1940 = vmax.f32 %v1932, 0.0
  %v1941 = vmax.f32 %v1935, 0.0
  %v1942 = vpack.c.bf16 %v1939, %v1938
  %v1943 = vpack.c.bf16 %v1941, %v1940
  %v1944 = vld [vmem:[%s2 + $0x98] sm:$0xf]
  %v1945 = vld [vmem:[%s2 + $0x9c] sm:$0xf]
  %v1946 = vld [vmem:[%s2 + $0xa0] sm:$0xf]
  %v1947 = vld [vmem:[%s2 + $0xa4] sm:$0xf]
  %v1948 = vld [vmem:[%s2 + $0xa8] sm:$0xf]
  %v1949 = vld [vmem:[%s2 + $0xac] sm:$0xf]
  %v1950 = vld [vmem:[%s2 + $0xb0] sm:$0xf]
  %v1951 = vld [vmem:[%s2 + $0xb4] sm:$0xf]
  %v1952 = vld [vmem:[%s3 + $0xd] sm:$0x1]
  %v1953 = vlaneseq
  %v1954 = vshrl.u32 %v1953, 7
  %v1955 = vsub.s32 0, %v1954
  %v1956 = vrot.slane %v1952, %v1955
  %v1965 = vunpack.c.l.b16 %v1944
  %v1966 = vunpack.c.l.b16 %v1945
  %v1967 = vunpack.c.l.b16 %v1946
  %v1968 = vunpack.c.l.b16 %v1947
  %v1969 = vunpack.c.l.b16 %v1948
  %v1970 = vunpack.c.l.b16 %v1949
  %v1971 = vunpack.c.l.b16 %v1950
  %v1972 = vunpack.c.l.b16 %v1951
  %v1973 = vpack.c.b16 %v1966, %v1965
  %v1974 = vpack.c.b16 %v1968, %v1967
  %v1975 = vpack.c.b16 %v1970, %v1969
  %v1976 = vpack.c.b16 %v1972, %v1971
  %v1982 = vsel %vm980, %v1942, 0
  %v1985 = vsel %vm980, %v1943, 0
  %1987 = vmatprep.subr.bf16.mxu0 0
  %1988 = vmatpush1.bf16.msra.mxu0 %v1973
  %1989 = vmatprep.subr.bf16.mxu0 0
  %1990 = vmatpush1.bf16.msra.mxu0 %v1974
  %1991 = vmatprep.subr.bf16.mxu0 0
  %1992 = vmatpush1.bf16.msra.mxu0 %v1975
  %1993 = vmatprep.subr.bf16.mxu0 0
  %1994 = vmatpush1.bf16.msra.mxu0 %v1976
  %1995 = vmatprep.subr.bf16.mxu0 0
  %1996 = vmatpush1.bf16.msra.mxu0 0
  %1997 = vmatprep.subr.bf16.mxu0 0
  %1998 = vmatpush1.bf16.msra.mxu0 0
  %1999 = vmatprep.subr.bf16.mxu0 0
  %2000 = vmatpush1.bf16.msra.mxu0 0
  %2001 = vmatprep.subr.bf16.mxu0 0
  %2002 = vmatpush1.bf16.msra.mxu0 0
  %2003 = vmatprep.subr.bf16.mxu0 0
  %2004 = vmatpush1.bf16.msra.mxu0 0
  %2005 = vmatprep.subr.bf16.mxu0 0
  %2006 = vmatpush1.bf16.msra.mxu0 0
  %2007 = vmatprep.subr.bf16.mxu0 0
  %2008 = vmatpush1.bf16.msra.mxu0 0
  %2009 = vmatprep.subr.bf16.mxu0 0
  %2010 = vmatpush1.bf16.msra.mxu0 0
  %2011 = vmatprep.subr.bf16.mxu0 0
  %2012 = vmatpush1.bf16.msra.mxu0 0
  %2013 = vmatprep.subr.bf16.mxu0 0
  %2014 = vmatpush1.bf16.msra.mxu0 0
  %2015 = vmatprep.subr.bf16.mxu0 0
  %2016 = vmatpush1.bf16.msra.mxu0 0
  %2017 = vmatprep.subr.bf16.mxu0 0
  %2018 = vmatpush1.bf16.msra.mxu0 0
  %2019 = vmatprep.mubr.bf16.mxu0 0
  %2020 = vmatmul.mubr.bf16.gmra.mrb[0].mxu0 %v1982
  %v2021 = vpop.f32.mrb[0].mxu0
  %v2022 = vadd.f32 %v1956, %v2021
  %v2023 = vpop.f32.mrb[0].mxu0
  %v2024 = vpop.f32.mrb[0].mxu0
  %v2025 = vadd.f32 %v1956, %v2024
  %v2026 = vpop.f32.mrb[0].mxu0
  %2027 = vmatprep.mubr.bf16.mxu0 0
  %2028 = vmatmul.mubr.bf16.gmra.mrb[0].mxu0 %v1985
  %v2029 = vpop.f32.mrb[0].mxu0
  %v2030 = vadd.f32 %v1956, %v2029
  %v2031 = vpop.f32.mrb[0].mxu0
  %v2032 = vpop.f32.mrb[0].mxu0
  %v2033 = vadd.f32 %v1956, %v2032
  %v2034 = vpop.f32.mrb[0].mxu0
  %2035 = vdwg.mxu0
  %v2036 = vadd.f32 %v1856, %v2022
  %v2037 = vadd.f32 %v1857, %v2025
  %v2038 = vadd.f32 %v1858, %v2030
  %v2039 = vadd.f32 %v1859, %v2033
  %v2040 = vsel %vm129, %v2036, 0.0
  %2041 = vadd.xlane.f32.xlu0 %v2040
  %v2042 = vpop.xlane.xlu0 %2041
  %v2043 = vsel %vm129, %v2037, 0.0
  %2044 = vadd.xlane.f32.xlu0 %v2043
  %v2045 = vpop.xlane.xlu0 %2044
  %v2046 = vsel %vm129, %v2038, 0.0
  %2047 = vadd.xlane.f32.xlu0 %v2046
  %v2048 = vpop.xlane.xlu0 %2047
  %v2049 = vsel %vm129, %v2039, 0.0
  %2050 = vadd.xlane.f32.xlu0 %v2049
  %v2051 = vpop.xlane.xlu0 %2050
  %v2052 = vmul.f32 %v2042, %v800
  %v2053 = vmul.f32 %v2045, %v800
  %v2054 = vmul.f32 %v2048, %v800
  %v2055 = vmul.f32 %v2051, %v800
  %v2056 = vsub.f32 %v2036, %v2052
  %v2057 = vsub.f32 %v2037, %v2053
  %v2058 = vsub.f32 %v2038, %v2054
  %v2059 = vsub.f32 %v2039, %v2055
  %v2060 = vmul.f32 %v2056, %v2056
  %v2061 = vmul.f32 %v2057, %v2057
  %v2062 = vmul.f32 %v2058, %v2058
  %v2063 = vmul.f32 %v2059, %v2059
  %v2064 = vsel %vm129, %v2060, 0.0
  %2065 = vadd.xlane.f32.xlu0 %v2064
  %v2066 = vpop.xlane.xlu0 %2065
  %v2067 = vsel %vm129, %v2061, 0.0
  %2068 = vadd.xlane.f32.xlu0 %v2067
  %v2069 = vpop.xlane.xlu0 %2068
  %v2070 = vsel %vm129, %v2062, 0.0
  %2071 = vadd.xlane.f32.xlu0 %v2070
  %v2072 = vpop.xlane.xlu0 %2071
  %v2073 = vsel %vm129, %v2063, 0.0
  %2074 = vadd.xlane.f32.xlu0 %v2073
  %v2075 = vpop.xlane.xlu0 %2074
  %v2076 = vmul.f32 %v2066, %v800
  %v2077 = vmul.f32 %v2069, %v800
  %v2078 = vmul.f32 %v2072, %v800
  %v2079 = vmul.f32 %v2075, %v800
  %v2080 = vadd.f32 %v2076, 1e-05
  %v2081 = vadd.f32 %v2077, 1e-05
  %v2082 = vadd.f32 %v2078, 1e-05
  %v2083 = vadd.f32 %v2079, 1e-05
  %v2084 = vrsqrt.pop %v2080
  %v2085 = vrsqrt.pop %v2081
  %v2086 = vrsqrt.pop %v2082
  %v2087 = vrsqrt.pop %v2083
  %v2088 = vmul.f32 %v2056, %v2084
  %v2089 = vmul.f32 %v2057, %v2085
  %v2090 = vmul.f32 %v2058, %v2086
  %v2091 = vmul.f32 %v2059, %v2087
  %v2092 = vld [vmem:[%s3 + $0xe] sm:$0x1]
  %v2093 = vlaneseq
  %v2094 = vshrl.u32 %v2093, 7
  %v2095 = vsub.s32 0, %v2094
  %v2096 = vrot.slane %v2092, %v2095
  %v2097 = vmul.f32 %v2088, %v2096
  %v2098 = vmul.f32 %v2089, %v2096
  %v2099 = vmul.f32 %v2090, %v2096
  %v2100 = vmul.f32 %v2091, %v2096
  %v2101 = vld [vmem:[%s3 + $0xf] sm:$0x1]
  %v2102 = vlaneseq
  %v2103 = vshrl.u32 %v2102, 7
  %v2104 = vsub.s32 0, %v2103
  %v2105 = vrot.slane %v2101, %v2104
  %v2106 = vadd.f32 %v2097, %v2105
  %v2107 = vadd.f32 %v2098, %v2105
  %v2108 = vadd.f32 %v2099, %v2105
  %v2109 = vadd.f32 %v2100, %v2105
  %v2110 = vpack.c.bf16 %v2107, %v2106
  %v2111 = vpack.c.bf16 %v2109, %v2108
  %v2112 = vld [vmem:[%s2 + $0xb8] sm:$0xf]
  %v2113 = vld [vmem:[%s2 + $0xbc] sm:$0xf]
  %v2114 = vld [vmem:[%s2 + $0xc0] sm:$0xf]
  %v2115 = vld [vmem:[%s2 + $0xc4] sm:$0xf]
  %v2116 = vld [vmem:[%s3 + $0x10] sm:$0x1]
  %v2117 = vlaneseq
  %v2118 = vshrl.u32 %v2117, 7
  %v2119 = vsub.s32 0, %v2118
  %v2120 = vrot.slane %v2116, %v2119
  %v2125 = vunpack.c.l.b16 %v2112
  %v2126 = vunpack.c.l.b16 %v2113
  %v2127 = vunpack.c.l.b16 %v2114
  %v2128 = vunpack.c.l.b16 %v2115
  %v2129 = vpack.c.b16 %v2126, %v2125
  %v2130 = vpack.c.b16 %v2128, %v2127
  %v2134 = vsel %vm129, %v2110, 0
  %v2137 = vsel %vm129, %v2111, 0
  %2139 = vmatprep.subr.bf16.mxu0 0
  %2140 = vmatpush1.bf16.msra.mxu0 %v2129
  %2141 = vmatprep.subr.bf16.mxu0 0
  %2142 = vmatpush1.bf16.msra.mxu0 %v2130
  %2143 = vmatprep.subr.bf16.mxu0 0
  %2144 = vmatpush1.bf16.msra.mxu0 0
  %2145 = vmatprep.subr.bf16.mxu0 0
  %2146 = vmatpush1.bf16.msra.mxu0 0
  %2147 = vmatprep.subr.bf16.mxu0 0
  %2148 = vmatpush1.bf16.msra.mxu0 0
  %2149 = vmatprep.subr.bf16.mxu0 0
  %2150 = vmatpush1.bf16.msra.mxu0 0
  %2151 = vmatprep.subr.bf16.mxu0 0
  %2152 = vmatpush1.bf16.msra.mxu0 0
  %2153 = vmatprep.subr.bf16.mxu0 0
  %2154 = vmatpush1.bf16.msra.mxu0 0
  %2155 = vmatprep.subr.bf16.mxu0 0
  %2156 = vmatpush1.bf16.msra.mxu0 0
  %2157 = vmatprep.subr.bf16.mxu0 0
  %2158 = vmatpush1.bf16.msra.mxu0 0
  %2159 = vmatprep.subr.bf16.mxu0 0
  %2160 = vmatpush1.bf16.msra.mxu0 0
  %2161 = vmatprep.subr.bf16.mxu0 0
  %2162 = vmatpush1.bf16.msra.mxu0 0
  %2163 = vmatprep.subr.bf16.mxu0 0
  %2164 = vmatpush1.bf16.msra.mxu0 0
  %2165 = vmatprep.subr.bf16.mxu0 0
  %2166 = vmatpush1.bf16.msra.mxu0 0
  %2167 = vmatprep.subr.bf16.mxu0 0
  %2168 = vmatpush1.bf16.msra.mxu0 0
  %2169 = vmatprep.subr.bf16.mxu0 0
  %2170 = vmatpush1.bf16.msra.mxu0 0
  %2171 = vmatprep.mubr.bf16.mxu0 0
  %2172 = vmatmul.mubr.bf16.gmra.mrb[0].mxu0 %v2134
  %v2173 = vpop.f32.mrb[0].mxu0
  %v2174 = vadd.f32 %v2120, %v2173
  %v2175 = vpop.f32.mrb[0].mxu0
  %v2176 = vpop.f32.mrb[0].mxu0
  %v2177 = vadd.f32 %v2120, %v2176
  %v2178 = vpop.f32.mrb[0].mxu0
  %2179 = vmatprep.mubr.bf16.mxu0 0
  %2180 = vmatmul.mubr.bf16.gmra.mrb[0].mxu0 %v2137
  %v2181 = vpop.f32.mrb[0].mxu0
  %v2182 = vadd.f32 %v2120, %v2181
  %v2183 = vpop.f32.mrb[0].mxu0
  %v2184 = vpop.f32.mrb[0].mxu0
  %v2185 = vadd.f32 %v2120, %v2184
  %v2186 = vpop.f32.mrb[0].mxu0
  %2187 = vdwg.mxu0
  %v2188 = vmax.f32 %v2174, 0.0
  %v2189 = vmax.f32 %v2177, 0.0
  %v2190 = vmax.f32 %v2182, 0.0
  %v2191 = vmax.f32 %v2185, 0.0
  %v2192 = vpack.c.bf16 %v2189, %v2188
  %v2193 = vpack.c.bf16 %v2191, %v2190
  %v2194 = vld [vmem:[%s2 + $0xc8] sm:$0xf]
  %v2195 = vld [vmem:[%s2 + $0xcc] sm:$0xf]
  %v2196 = vld [vmem:[%s2 + $0xd0] sm:$0xf]
  %v2197 = vld [vmem:[%s2 + $0xd4] sm:$0xf]
  %v2198 = vld [vmem:[%s2 + $0xd8] sm:$0xf]
  %v2199 = vld [vmem:[%s2 + $0xdc] sm:$0xf]
  %v2200 = vld [vmem:[%s2 + $0xe0] sm:$0xf]
  %v2201 = vld [vmem:[%s2 + $0xe4] sm:$0xf]
  %v2202 = vld [vmem:[%s3 + $0x11] sm:$0x1]
  %v2203 = vlaneseq
  %v2204 = vshrl.u32 %v2203, 7
  %v2205 = vsub.s32 0, %v2204
  %v2206 = vrot.slane %v2202, %v2205
  %v2215 = vunpack.c.l.b16 %v2194
  %v2216 = vunpack.c.l.b16 %v2195
  %v2217 = vunpack.c.l.b16 %v2196
  %v2218 = vunpack.c.l.b16 %v2197
  %v2219 = vunpack.c.l.b16 %v2198
  %v2220 = vunpack.c.l.b16 %v2199
  %v2221 = vunpack.c.l.b16 %v2200
  %v2222 = vunpack.c.l.b16 %v2201
  %v2223 = vpack.c.b16 %v2216, %v2215
  %v2224 = vpack.c.b16 %v2218, %v2217
  %v2225 = vpack.c.b16 %v2220, %v2219
  %v2226 = vpack.c.b16 %v2222, %v2221
  %v2232 = vsel %vm980, %v2192, 0
  %v2235 = vsel %vm980, %v2193, 0
  %2237 = vmatprep.subr.bf16.mxu0 0
  %2238 = vmatpush1.bf16.msra.mxu0 %v2223
  %2239 = vmatprep.subr.bf16.mxu0 0
  %2240 = vmatpush1.bf16.msra.mxu0 %v2224
  %2241 = vmatprep.subr.bf16.mxu0 0
  %2242 = vmatpush1.bf16.msra.mxu0 %v2225
  %2243 = vmatprep.subr.bf16.mxu0 0
  %2244 = vmatpush1.bf16.msra.mxu0 %v2226
  %2245 = vmatprep.subr.bf16.mxu0 0
  %2246 = vmatpush1.bf16.msra.mxu0 0
  %2247 = vmatprep.subr.bf16.mxu0 0
  %2248 = vmatpush1.bf16.msra.mxu0 0
  %2249 = vmatprep.subr.bf16.mxu0 0
  %2250 = vmatpush1.bf16.msra.mxu0 0
  %2251 = vmatprep.subr.bf16.mxu0 0
  %2252 = vmatpush1.bf16.msra.mxu0 0
  %2253 = vmatprep.subr.bf16.mxu0 0
  %2254 = vmatpush1.bf16.msra.mxu0 0
  %2255 = vmatprep.subr.bf16.mxu0 0
  %2256 = vmatpush1.bf16.msra.mxu0 0
  %2257 = vmatprep.subr.bf16.mxu0 0
  %2258 = vmatpush1.bf16.msra.mxu0 0
  %2259 = vmatprep.subr.bf16.mxu0 0
  %2260 = vmatpush1.bf16.msra.mxu0 0
  %2261 = vmatprep.subr.bf16.mxu0 0
  %2262 = vmatpush1.bf16.msra.mxu0 0
  %2263 = vmatprep.subr.bf16.mxu0 0
  %2264 = vmatpush1.bf16.msra.mxu0 0
  %2265 = vmatprep.subr.bf16.mxu0 0
  %2266 = vmatpush1.bf16.msra.mxu0 0
  %2267 = vmatprep.subr.bf16.mxu0 0
  %2268 = vmatpush1.bf16.msra.mxu0 0
  %2269 = vmatprep.mubr.bf16.mxu0 0
  %2270 = vmatmul.mubr.bf16.gmra.mrb[0].mxu0 %v2232
  %v2271 = vpop.f32.mrb[0].mxu0
  %v2272 = vadd.f32 %v2206, %v2271
  %v2273 = vpop.f32.mrb[0].mxu0
  %v2274 = vpop.f32.mrb[0].mxu0
  %v2275 = vadd.f32 %v2206, %v2274
  %v2276 = vpop.f32.mrb[0].mxu0
  %2277 = vmatprep.mubr.bf16.mxu0 0
  %2278 = vmatmul.mubr.bf16.gmra.mrb[0].mxu0 %v2235
  %v2279 = vpop.f32.mrb[0].mxu0
  %v2280 = vadd.f32 %v2206, %v2279
  %v2281 = vpop.f32.mrb[0].mxu0
  %v2282 = vpop.f32.mrb[0].mxu0
  %v2283 = vadd.f32 %v2206, %v2282
  %v2284 = vpop.f32.mrb[0].mxu0
  %2285 = vdwg.mxu0
  %vm2286 = vcmask 31744
  %2287 = vst.msk [vmem:[%s4] sm:$0xff] %vm2286, %v2272
  %2288 = vst.msk [vmem:[%s4 + $0x8] sm:$0xff] %vm2286, %v2275
  %2289 = vst.msk [vmem:[%s4 + $0x10] sm:$0xff] %vm2286, %v2280
  %2290 = vst.msk [vmem:[%s4 + $0x18] sm:$0xff] %vm2286, %v2283
  // Predicated region
  $region18: #{nrtsi_imputer_forward.1} parent=0 // pred_check
    _
  $region19: #{nrtsi_imputer_forward.1} parent=0 // pred_check_branch
    %2292 = sbr.rel (0) target = $region21
  $region20: #{nrtsi_imputer_forward.1} parent=0 // pred_region
    _
  $region21: #{nrtsi_imputer_forward.1} parent=0 // pred_fallthru
    _
  // Predicated region
  $region22: #{nrtsi_imputer_forward.1} parent=0 // pred_check
    _
  $region23: #{nrtsi_imputer_forward.1} parent=0 // pred_check_branch
    %2294 = sbr.rel (0) target = $region25
  $region24: #{nrtsi_imputer_forward.1} parent=0 // pred_region
    _
  $region25: #{nrtsi_imputer_forward.1} parent=0 // pred_fallthru
    _

</llo_original>
